<compile_context>
chip_gen: v6e
topology: v6e:2x2x1
jax: 0.10.0
libtpu: 0.0.40
codegen_flags: <defaults>
</compile_context>

<pallas_src>
import math

import numpy as np
import jax
import jax.numpy as jnp
from jax.experimental import pallas as pl
from jax.experimental.pallas import tpu as pltpu

DTYPE = jnp.float32          # parameters / epilogue math
ACT_DTYPE = jnp.bfloat16     # activations between kernels
BN_EPS = 1e-5
LANE = 128
ROW_TILE_CAP = 512           # keeps bf16 (TM, K) tiles comfortably inside v7x's 64 MiB VMEM
VMEM_LIMIT = 32 * 1024 * 1024


def _mosaic(n_axes):
    return pltpu.CompilerParams(dimension_semantics=("parallel",) * n_axes,
                                vmem_limit_bytes=VMEM_LIMIT)


def _row_tile(rows, cap=ROW_TILE_CAP):
    if rows <= cap:
        return rows
    for t in (cap, 256, 128, 64, 32, 16, 8):
        if rows % t == 0:
            return t
    return cap


# --------------------------------------------------------------------------
# Pallas kernels
# --------------------------------------------------------------------------

def _mm_epilogue_kernel(x_ref, w_ref, scale_ref, shift_ref, alpha_ref, gate_ref, o_ref):
    # y = prelu((x @ w) * scale + shift) * gate ; PReLU(alpha=1)=identity, (alpha=0)=ReLU.
    y = jnp.dot(x_ref[...], w_ref[...], preferred_element_type=jnp.float32)
    y = y * scale_ref[...] + shift_ref[...]
    y = jnp.where(y > 0, y, y * alpha_ref[...])
    o_ref[...] = (y * gate_ref[0]).astype(o_ref.dtype)


def matmul_affine_act(x, w, scale, shift, alpha, gate=None, batch=1):
    """prelu((x @ w) * scale + shift, alpha) * gate  on the MXU (bf16 in, f32 epilogue).

    x: (M, K) with rows of each batch element contiguous (M = batch * rows); w: (K, N).
    N is zero-padded to a multiple of 128 for lane-dense stores and sliced off afterwards.
    gate (optional): (batch, 1, N) per-batch channel gate fused into the epilogue.
    """
    M, K = x.shape
    N = w.shape[1]
    Np = max(LANE, ((N + LANE - 1) // LANE) * LANE)
    if Np != N:
        w = jnp.pad(w, ((0, 0), (0, Np - N)))
        scale = jnp.pad(scale, (0, Np - N), constant_values=1.0)
        shift = jnp.pad(shift, (0, Np - N))
        alpha = jnp.pad(alpha, (0, Np - N), constant_values=1.0)
    rows = M // batch
    TM = _row_tile(rows)
    Mp = M
    if rows % TM != 0:
        if batch == 1:           # rare ragged case only (not hit for this model's shapes)
            Mp = ((M + TM - 1) // TM) * TM
            x = jnp.pad(x, ((0, Mp - M), (0, 0)))
            rows = Mp
        else:
            TM = rows            # one block per batch element
    nblk = rows // TM
    if gate is None:
        gate_arr = jnp.ones((batch, 1, Np), DTYPE)
    else:
        gate_arr = gate.reshape(batch, 1, N).astype(DTYPE)
        if Np != N:
            gate_arr = jnp.pad(gate_arr, ((0, 0), (0, 0), (0, Np - N)), constant_values=1.0)
    out = pl.pallas_call(
        _mm_epilogue_kernel,
        out_shape=jax.ShapeDtypeStruct((Mp, Np), ACT_DTYPE),
        grid=(batch, nblk),
        in_specs=[
            pl.BlockSpec((TM, K), lambda b, j: (b * nblk + j, 0)),
            pl.BlockSpec((K, Np), lambda b, j: (0, 0)),
            pl.BlockSpec((1, Np), lambda b, j: (0, 0)),
            pl.BlockSpec((1, Np), lambda b, j: (0, 0)),
            pl.BlockSpec((1, Np), lambda b, j: (0, 0)),
            pl.BlockSpec((1, 1, Np), lambda b, j: (b, 0, 0)),
        ],
        out_specs=pl.BlockSpec((TM, Np), lambda b, j: (b * nblk + j, 0)),
        compiler_params=_mosaic(2),
    )(x.astype(ACT_DTYPE), w.astype(ACT_DTYPE),
      scale.reshape(1, Np).astype(DTYPE), shift.reshape(1, Np).astype(DTYPE),
      alpha.reshape(1, Np).astype(DTYPE), gate_arr)
    if Mp != M or Np != N:
        out = out[:M, :N]
    return out


def _dw_epilogue(acc, scale_ref, shift_ref, alpha_ref, gate_ref):
    y = acc * scale_ref[...] + shift_ref[...]
    y = jnp.where(y > 0, y, y * alpha_ref[...])
    return y * gate_ref[0]


def _dw3x3_s1_kernel(x_ref, w_ref, scale_ref, shift_ref, alpha_ref, gate_ref, o_ref):
    # Depthwise 3x3, stride 1: 9 shifted (Ho, Wo, C) windows of the padded plane,
    # multiply-accumulated on the VPU with per-channel tap weights (no MXU, no im2col).
    _, Ho, Wo, C = o_ref.shape
    acc = jnp.zeros((Ho, Wo, C), jnp.float32)
    t = 0
    for dy in range(3):
        for dx in range(3):
            win = x_ref[0, pl.ds(dy, Ho), pl.ds(dx, Wo), :]
            acc = acc + win.astype(jnp.float32) * w_ref[t]
            t += 1
    y = _dw_epilogue(acc, scale_ref, shift_ref, alpha_ref, gate_ref)
    o_ref[...] = y[None].astype(o_ref.dtype)


def _dw3x3_s2_kernel(p00_ref, p01_ref, p10_ref, p11_ref, w_ref,
                     scale_ref, shift_ref, alpha_ref, gate_ref, o_ref):
    # Depthwise 3x3, stride 2: input pre-split (in glue) into 4 row/col parity planes so
    # every tap becomes a plain (non-strided) shifted window load.
    _, Ho, Wo, C = o_ref.shape
    planes = (p00_ref, p01_ref, p10_ref, p11_ref)
    acc = jnp.zeros((Ho, Wo, C), jnp.float32)
    t = 0
    for dy in range(3):
        for dx in range(3):
            pref = planes[(dy % 2) * 2 + (dx % 2)]
            win = pref[0, pl.ds(dy // 2, Ho), pl.ds(dx // 2, Wo), :]
            acc = acc + win.astype(jnp.float32) * w_ref[t]
            t += 1
    y = _dw_epilogue(acc, scale_ref, shift_ref, alpha_ref, gate_ref)
    o_ref[...] = y[None].astype(o_ref.dtype)


def depthwise3x3(x, w, scale, shift, alpha, gate, stride):
    """Depthwise 3x3 conv (padding=1, stride 1 or 2) + folded BN/bias + PReLU + gate."""
    Nb, H, W, C = x.shape
    Ho = (H - 1) // stride + 1
    Wo = (W - 1) // stride + 1
    w_taps = jnp.transpose(w.reshape(C, 9), (1, 0)).reshape(9, 1, C).astype(DTYPE)
    scale = scale.reshape(1, C).astype(DTYPE)
    shift = shift.reshape(1, C).astype(DTYPE)
    alpha = alpha.reshape(1, C).astype(DTYPE)
    gate_arr = (jnp.ones((Nb, 1, C), DTYPE) if gate is None
                else gate.reshape(Nb, 1, C).astype(DTYPE))
    xp = jnp.pad(x.astype(ACT_DTYPE), ((0, 0), (1, 1), (1, 1), (0, 0)))
    vec = pl.BlockSpec((1, C), lambda b: (0, 0))
    tap_spec = pl.BlockSpec((9, 1, C), lambda b: (0, 0, 0))
    gate_spec = pl.BlockSpec((1, 1, C), lambda b: (b, 0, 0))
    out_spec = pl.BlockSpec((1, Ho, Wo, C), lambda b: (b, 0, 0, 0))
    out_shape = jax.ShapeDtypeStruct((Nb, Ho, Wo, C), ACT_DTYPE)
    if stride == 1:
        Hp, Wp = H + 2, W + 2
        return pl.pallas_call(
            _dw3x3_s1_kernel,
            out_shape=out_shape,
            grid=(Nb,),
            in_specs=[pl.BlockSpec((1, Hp, Wp, C), lambda b: (b, 0, 0, 0)),
                      tap_spec, vec, vec, vec, gate_spec],
            out_specs=out_spec,
            compiler_params=_mosaic(1),
        )(xp, w_taps, scale, shift, alpha, gate_arr)
    # stride == 2: split the padded input into four (row, col) parity planes.
    Hp, Wp = H + 2, W + 2
    Hp2, Wp2 = Hp + (Hp % 2), Wp + (Wp % 2)
    xp = jnp.pad(xp, ((0, 0), (0, Hp2 - Hp), (0, Wp2 - Wp), (0, 0)))
    planes = [xp[:, a::2, c::2, :] for a in (0, 1) for c in (0, 1)]
    Hq, Wq = Hp2 // 2, Wp2 // 2
    plane_spec = pl.BlockSpec((1, Hq, Wq, C), lambda b: (b, 0, 0, 0))
    return pl.pallas_call(
        _dw3x3_s2_kernel,
        out_shape=out_shape,
        grid=(Nb,),
        in_specs=[plane_spec] * 4 + [tap_spec, vec, vec, vec, gate_spec],
        out_specs=out_spec,
        compiler_params=_mosaic(1),
    )(*planes, w_taps, scale, shift, alpha, gate_arr)


def _gap_mm_sigmoid_kernel(x_ref, w_ref, o_ref):
    pooled = jnp.mean(x_ref[0].astype(jnp.float32), axis=0, keepdims=True)   # (1, Cin)
    y = jnp.dot(pooled, w_ref[...], preferred_element_type=jnp.float32)      # (1, Cout)
    o_ref[...] = (1.0 / (1.0 + jnp.exp(-y)))[None].astype(o_ref.dtype)


def gap_matmul_sigmoid(x, w):
    """sigmoid(global_avg_pool(x) @ w): x (Nb, HW, Cin), w (Cin, Cout) -> (Nb, 1, Cout)."""
    Nb, HW, Cin = x.shape
    Cout = w.shape[1]
    return pl.pallas_call(
        _gap_mm_sigmoid_kernel,
        out_shape=jax.ShapeDtypeStruct((Nb, 1, Cout), DTYPE),
        grid=(Nb,),
        in_specs=[pl.BlockSpec((1, HW, Cin), lambda b: (b, 0, 0)),
                  pl.BlockSpec((Cin, Cout), lambda b: (0, 0))],
        out_specs=pl.BlockSpec((1, 1, Cout), lambda b: (b, 0, 0)),
        compiler_params=_mosaic(1),
    )(x.astype(ACT_DTYPE), w.astype(DTYPE))


def _bn_prelu_kernel(x_ref, scale_ref, shift_ref, alpha_ref, o_ref):
    y = x_ref[...].astype(jnp.float32) * scale_ref[...] + shift_ref[...]
    o_ref[...] = jnp.where(y > 0, y, y * alpha_ref[...]).astype(o_ref.dtype)


def _add_bn_prelu_kernel(a_ref, b_ref, scale_ref, shift_ref, alpha_ref, o_ref):
    y = (a_ref[...].astype(jnp.float32) + b_ref[...].astype(jnp.float32)
         ) * scale_ref[...] + shift_ref[...]
    o_ref[...] = jnp.where(y > 0, y, y * alpha_ref[...]).astype(o_ref.dtype)


def _elementwise_bn(xs, kernel, scale, shift, alpha):
    M, C = xs[0].shape
    TM = _row_tile(M)
    Mp = M if M % TM == 0 else ((M + TM - 1) // TM) * TM
    xs = [x.astype(ACT_DTYPE) for x in xs]
    if Mp != M:
        xs = [jnp.pad(x, ((0, Mp - M), (0, 0))) for x in xs]
    row = pl.BlockSpec((TM, C), lambda i: (i, 0))
    vec = pl.BlockSpec((1, C), lambda i: (0, 0))
    out = pl.pallas_call(
        kernel,
        out_shape=jax.ShapeDtypeStruct((Mp, C), ACT_DTYPE),
        grid=(Mp // TM,),
        in_specs=[row] * len(xs) + [vec, vec, vec],
        out_specs=row,
        compiler_params=_mosaic(1),
    )(*xs, scale.reshape(1, C).astype(DTYPE), shift.reshape(1, C).astype(DTYPE),
      alpha.reshape(1, C).astype(DTYPE))
    return out[:M]


def bn_prelu(x, scale, shift, alpha):
    return _elementwise_bn([x], _bn_prelu_kernel, scale, shift, alpha)


def add_bn_prelu(a, b, scale, shift, alpha):
    return _elementwise_bn([a, b], _add_bn_prelu_kernel, scale, shift, alpha)


# --------------------------------------------------------------------------
# Convolution glue
# --------------------------------------------------------------------------

def weight_to_matrix(w, groups, cin):
    """PyTorch (Cout, Cin/g, kh, kw) grouped-conv weight -> dense block-diagonal
    (kh*kw*Cin, Cout) matrix matching the tap-major / channel-minor im2col layout."""
    cout, cin_g, kh, kw = w.shape
    out_g = cout // groups
    wt = jnp.transpose(w.reshape(groups, out_g, cin_g, kh, kw), (3, 4, 0, 2, 1))
    eye = jnp.eye(groups, dtype=w.dtype)
    full = wt[:, :, :, :, None, :] * eye[None, None, :, None, :, None]
    return full.reshape(kh * kw * cin, cout)


def conv_bn_act(x, w, *, stride=1, padding=0, groups=1, bias=None, bn=None,
                act="none", alpha=None, gate=None, input_perm=None):
    """Conv2d (PyTorch semantics) + folded BatchNorm/bias + PReLU/ReLU + channel gate.

    Dispatch: depthwise 3x3 -> VPU kernel; 1x1 -> direct MXU matmul (free reshape);
    other grouped/full 3x3 -> small JAX im2col + block-diagonal MXU matmul.
    """
    x = x.astype(ACT_DTYPE)
    Nb, H, W, Cin = x.shape
    Cout, _, kh, kw = w.shape
    scale = jnp.ones((Cout,), DTYPE)
    shift = jnp.zeros((Cout,), DTYPE) if bias is None else bias.astype(DTYPE)
    if bn is not None:
        gamma, beta, mean, var = bn
        s = gamma * jax.lax.rsqrt(var + BN_EPS)
        shift = (shift - mean) * s + beta
        scale = scale * s
    if act == "prelu":
        alpha_eff = alpha.astype(DTYPE)
    elif act == "relu":
        alpha_eff = jnp.zeros((Cout,), DTYPE)
    else:
        alpha_eff = jnp.ones((Cout,), DTYPE)          # PReLU with alpha=1 == identity

    if (groups == Cin and Cout == Cin and kh == 3 and kw == 3 and padding == 1
            and stride in (1, 2) and input_perm is None):
        return depthwise3x3(x, w, scale, shift, alpha_eff, gate, stride)

    Ho = (H + 2 * padding - kh) // stride + 1
    Wo = (W + 2 * padding - kw) // stride + 1
    if kh == 1 and kw == 1 and groups == 1 and padding == 0 and stride == 1:
        patches = x.reshape(Nb * H * W, Cin)
        wm = w.reshape(Cout, Cin).T
    else:
        # TODO(synk): the remaining (small) non-depthwise 3x3 convs still materialize an
        # im2col in HBM; in-kernel tap accumulation was only implemented for depthwise.
        xp = jnp.pad(x, ((0, 0), (padding, padding), (padding, padding), (0, 0)))
        cols = []
        for dy in range(kh):
            for dx in range(kw):
                cols.append(xp[:, dy:dy + (Ho - 1) * stride + 1:stride,
                                  dx:dx + (Wo - 1) * stride + 1:stride, :])
        patches = jnp.stack(cols, axis=3).reshape(Nb * Ho * Wo, kh * kw * Cin)
        wm = weight_to_matrix(w, groups, Cin)
    if input_perm is not None:   # fold channel_shuffle of the input into the weight rows
        wm = wm.reshape(kh * kw, Cin, Cout)[:, input_perm, :].reshape(kh * kw * Cin, Cout)
    if gate is not None and (Ho * Wo) % 8 == 0:
        y = matmul_affine_act(patches, wm, scale, shift, alpha_eff, gate=gate, batch=Nb)
    else:
        y = matmul_affine_act(patches, wm, scale, shift, alpha_eff)
        if gate is not None:
            y = (y.reshape(Nb, Ho * Wo, Cout) * gate.reshape(Nb, 1, Cout).astype(y.dtype)
                 ).reshape(Nb * Ho * Wo, Cout)
    return y.reshape(Nb, Ho, Wo, Cout)


# --------------------------------------------------------------------------
# Resampling (bilinear align_corners=True / adaptive average pooling)
# TODO(synk): resampling expressed as small separable linear maps in plain JAX glue.
# --------------------------------------------------------------------------

def bilinear_matrix(src, dst):
    if dst == 1:
        m = np.zeros((1, src), np.float64)
        m[0, 0] = 1.0
        return jnp.asarray(m, DTYPE)
    coords = np.arange(dst) * (src - 1) / (dst - 1)
    lo = np.clip(np.floor(coords).astype(np.int64), 0, src - 1)
    hi = np.minimum(lo + 1, src - 1)
    frac = coords - lo
    m = np.zeros((dst, src), np.float64)
    m[np.arange(dst), lo] += 1.0 - frac
    m[np.arange(dst), hi] += frac
    return jnp.asarray(m, DTYPE)


def adaptive_avg_matrix(src, dst):
    m = np.zeros((dst, src), np.float64)
    for i in range(dst):
        start = (i * src) // dst
        end = -((-(i + 1) * src) // dst)
        m[i, start:end] = 1.0 / (end - start)
    return jnp.asarray(m, DTYPE)


def _resize_sep(x, mh, mw):
    mh = mh.astype(x.dtype)
    mw = mw.astype(x.dtype)
    y = jnp.einsum("oh,nhwc->nowc", mh, x)
    return jnp.einsum("pw,nowc->nopc", mw, y)


def resize_bilinear(x, out_h, out_w):
    return _resize_sep(x, bilinear_matrix(x.shape[1], out_h),
                       bilinear_matrix(x.shape[2], out_w))


def adaptive_avg_pool(x, out_h, out_w):
    return _resize_sep(x, adaptive_avg_matrix(x.shape[1], out_h),
                       adaptive_avg_matrix(x.shape[2], out_w))


def channel_shuffle(x, groups):
    Nb, H, W, C = x.shape
    return x.reshape(Nb, H, W, groups, C // groups).swapaxes(3, 4).reshape(Nb, H, W, C)


def shuffle_perm(C, g):
    """Row permutation that folds channel_shuffle(x, g) into the next conv's weight."""
    cg = C // g
    return np.array([(c % cg) * g + c // cg for c in range(C)], np.int32)


# --------------------------------------------------------------------------
# Parameters (deterministic, kaiming-like init as in init_params())
# --------------------------------------------------------------------------

class ParamGen:
    def __init__(self, seed):
        self._key = jax.random.PRNGKey(seed)

    def _next(self):
        self._key, sub = jax.random.split(self._key)
        return sub

    def conv(self, cout, cin_g, kh, kw):
        std = math.sqrt(2.0 / (cout * kh * kw))  # kaiming_normal_(mode='fan_out')
        return std * jax.random.normal(self._next(), (cout, cin_g, kh, kw), DTYPE)


def make_bn(c):
    # TODO(synk): BatchNorm evaluated in inference mode (gamma=1, beta=0,
    # running_mean=0, running_var=1), not training-mode batch statistics.
    return (jnp.ones((c,), DTYPE), jnp.zeros((c,), DTYPE),
            jnp.zeros((c,), DTYPE), jnp.ones((c,), DTYPE))


def make_prelu(c):
    return jnp.full((c,), 0.25, DTYPE)


def make_cbr(pg, cin, cout, k, groups=1):
    return dict(w=pg.conv(cout, cin // groups, k, k), bn=make_bn(cout),
                alpha=make_prelu(cout), groups=groups, k=k)


def apply_cbr(p, x, stride=1, gate=None):
    return conv_bn_act(x, p["w"], stride=stride, padding=(p["k"] - 1) // 2,
                       groups=p["groups"], bn=p["bn"], act="prelu", alpha=p["alpha"],
                       gate=gate)


# TODO(synk): CNNModel (ShuffleNetV2 backbone) source is not provided; reconstructed
# here as CBR(3->C0, 3x3, s2) for level1 and a single ShuffleNetV2 stride-2
# inverted-residual block per level2/3/4 (block repeats reduced for this synthetic demo).
def make_shuffle_down(pg, cin, cout):
    half = cout // 2
    return dict(
        b1_dw=pg.conv(cin, 1, 3, 3), b1_dw_bn=make_bn(cin),
        b1_pw=pg.conv(half, cin, 1, 1), b1_pw_bn=make_bn(half),
        b2_pw1=pg.conv(half, cin, 1, 1), b2_pw1_bn=make_bn(half),
        b2_dw=pg.conv(half, 1, 3, 3), b2_dw_bn=make_bn(half),
        b2_pw2=pg.conv(half, half, 1, 1), b2_pw2_bn=make_bn(half),
    )


def apply_shuffle_down(p, x):
    cin = x.shape[-1]
    b1 = conv_bn_act(x, p["b1_dw"], stride=2, padding=1, groups=cin,
                     bn=p["b1_dw_bn"], act="none")
    b1 = conv_bn_act(b1, p["b1_pw"], bn=p["b1_pw_bn"], act="relu")
    b2 = conv_bn_act(x, p["b2_pw1"], bn=p["b2_pw1_bn"], act="relu")
    b2 = conv_bn_act(b2, p["b2_dw"], stride=2, padding=1, groups=b2.shape[-1],
                     bn=p["b2_dw_bn"], act="none")
    b2 = conv_bn_act(b2, p["b2_pw2"], bn=p["b2_pw2_bn"], act="relu")
    # TODO(synk): this interleaving shuffle is kept as a JAX reshape/transpose because its
    # output feeds multiple consumers; folding it into all their weights was too invasive.
    return channel_shuffle(jnp.concatenate([b1, b2], axis=-1), 2)


def make_eff_pw(pg, nin, nout):
    g = math.gcd(nin, nout)
    return dict(wt_w=pg.conv(nout, nin, 1, 1),
                exp=make_cbr(pg, nin, nout, 3, groups=g))


def apply_eff_pw(p, x):
    Nb, H, W, Cin = x.shape
    nout = p["wt_w"].shape[0]
    # fused global-avg-pool -> 1x1 -> sigmoid (one small Pallas kernel)
    gate = gap_matmul_sigmoid(x.reshape(Nb, H * W, Cin),
                              p["wt_w"].reshape(nout, Cin).T)         # (Nb, 1, nout)
    # gate multiply fused into the epilogue of the grouped / depthwise 3x3 CBR
    return apply_cbr(p["exp"], x, gate=gate)


def make_eff_pyr(pg, in_planes, proj_planes, out_planes, scales, last_layer_br=True):
    scales = sorted(scales, reverse=True)
    p = dict(
        scales=scales, last_br=last_layer_br,
        proj=make_cbr(pg, in_planes, proj_planes, 1),
        stages=[pg.conv(proj_planes, 1, 3, 3) for _ in scales],
        merge_bn=make_bn(proj_planes * len(scales)),
        merge_alpha=make_prelu(proj_planes * len(scales)),
        merge_cbr=make_cbr(pg, proj_planes * len(scales), proj_planes, 3,
                           groups=proj_planes),
        final_w=pg.conv(out_planes, proj_planes, 1, 1),
        final_b=None if last_layer_br else jnp.zeros((out_planes,), DTYPE),
    )
    if last_layer_br:
        p["br_bn"] = make_bn(out_planes)
        p["br_alpha"] = make_prelu(out_planes)
    return p


def apply_eff_pyr(p, x):
    Nb = x.shape[0]
    x = apply_cbr(p["proj"], x)
    H, W = x.shape[1], x.shape[2]
    hs = []
    for i, s in enumerate(p["scales"]):
        h_s = max(int(math.ceil(H * s)), 5)
        w_s = max(int(math.ceil(W * s)), 5)
        wk = p["stages"][i]
        if s < 1.0:
            h = adaptive_avg_pool(x, h_s, w_s)
            h = conv_bn_act(h, wk, stride=1, padding=1, groups=h.shape[-1])
            h = resize_bilinear(h, H, W)
        elif s > 1.0:
            h = resize_bilinear(x, h_s, w_s)
            h = conv_bn_act(h, wk, stride=1, padding=1, groups=h.shape[-1])
            h = adaptive_avg_pool(h, H, W)
        else:
            h = conv_bn_act(x, wk, stride=1, padding=1, groups=x.shape[-1])
        hs.append(h.astype(ACT_DTYPE))
    out = jnp.concatenate(hs, axis=-1)
    C = out.shape[-1]
    gamma, beta, mean, var = p["merge_bn"]
    s_bn = gamma * jax.lax.rsqrt(var + BN_EPS)
    out = bn_prelu(out.reshape(-1, C), s_bn, beta - mean * s_bn,
                   p["merge_alpha"]).reshape(Nb, H, W, C)
    # channel_shuffle(., len(scales)) folded into merge_cbr's weight rows (free at trace time)
    mc = p["merge_cbr"]
    out = conv_bn_act(out, mc["w"], stride=1, padding=1, groups=mc["groups"],
                      bn=mc["bn"], act="prelu", alpha=mc["alpha"],
                      input_perm=shuffle_perm(C, len(p["scales"])))
    if p["last_br"]:
        # final 1x1 conv + BatchNorm + PReLU fused into a single matmul epilogue
        out = conv_bn_act(out, p["final_w"], bn=p["br_bn"], act="prelu",
                          alpha=p["br_alpha"])
    else:
        out = conv_bn_act(out, p["final_w"], bias=p["final_b"])
    return out


def apply_bu_br(p, a, b):
    Nb, H, W, C = a.shape
    gamma, beta, mean, var = p["bn"]
    s = gamma * jax.lax.rsqrt(var + BN_EPS)
    y = add_bn_prelu(a.reshape(-1, C), b.reshape(-1, C), s, beta - mean * s, p["alpha"])
    return y.reshape(Nb, H, W, C)


# --------------------------------------------------------------------------
# Top-level module
# --------------------------------------------------------------------------

def build_params(seed=1234, classes=21, dataset="city", width_s=0.5):
    pg = ParamGen(seed)
    out_channel_map = {0.5: [24, 48, 96, 192, 1024],
                       1.0: [24, 116, 232, 464, 1024]}[width_s]
    config = out_channel_map
    base_dec = {"pascal": 16, "city": 16, "coco": 32}[dataset]
    dec = [4 * base_dec, 3 * base_dec, 2 * base_dec, classes]
    proj = min(classes // 2, base_dec)
    scales = [2.0, 1.5, 1.0, 0.5, 0.1]
    return dict(
        level1=make_cbr(pg, 3, config[0], 3),
        level2=make_shuffle_down(pg, config[0], config[1]),
        level3=make_shuffle_down(pg, config[1], config[2]),
        level4=make_shuffle_down(pg, config[2], config[3]),
        eff16=make_eff_pyr(pg, config[3], proj, dec[0], scales),
        eff32=make_eff_pyr(pg, dec[0], proj, dec[1], scales),
        eff64=make_eff_pyr(pg, dec[1], proj, dec[2], scales),
        eff128=make_eff_pyr(pg, dec[2], proj, dec[3], scales, last_layer_br=False),
        proj32=make_eff_pw(pg, config[2], dec[0]),
        proj64=make_eff_pw(pg, config[1], dec[1]),
        proj128=make_eff_pw(pg, config[0], dec[2]),
        bu_br32=dict(bn=make_bn(dec[0]), alpha=make_prelu(dec[0])),
        bu_br64=dict(bn=make_bn(dec[1]), alpha=make_prelu(dec[1])),
        bu_br128=dict(bn=make_bn(dec[2]), alpha=make_prelu(dec[2])),
    )


def forward(params, x_nchw):
    x = jnp.transpose(x_nchw, (0, 2, 3, 1)).astype(ACT_DTYPE)   # NCHW -> NHWC
    Hin, Win = x.shape[1], x.shape[2]

    enc128 = apply_cbr(params["level1"], x, stride=2)
    enc64 = apply_shuffle_down(params["level2"], enc128)
    enc32 = apply_shuffle_down(params["level3"], enc64)
    enc16 = apply_shuffle_down(params["level4"], enc32)

    bu16 = apply_eff_pyr(params["eff16"], enc16)
    bu32 = resize_bilinear(bu16, 2 * bu16.shape[1], 2 * bu16.shape[2])
    enc32p = apply_eff_pw(params["proj32"], enc32)
    bu32 = apply_bu_br(params["bu_br32"], enc32p, bu32)
    bu32 = apply_eff_pyr(params["eff32"], bu32)

    bu64 = resize_bilinear(bu32, 2 * bu32.shape[1], 2 * bu32.shape[2])
    enc64p = apply_eff_pw(params["proj64"], enc64)
    bu64 = apply_bu_br(params["bu_br64"], enc64p, bu64)
    bu64 = apply_eff_pyr(params["eff64"], bu64)

    bu128 = resize_bilinear(bu64, 2 * bu64.shape[1], 2 * bu64.shape[2])
    enc128p = apply_eff_pw(params["proj128"], enc128)
    bu128 = apply_bu_br(params["bu_br128"], enc128p, bu128)
    bu128 = apply_eff_pyr(params["eff128"], bu128)

    out = resize_bilinear(bu128, Hin, Win)                   # F.interpolate to input size
    return jnp.transpose(out, (0, 3, 1, 2)).astype(jnp.float32)   # NHWC -> NCHW


if __name__ == "__main__":
    params = build_params()
    x = jax.random.normal(jax.random.PRNGKey(0), (2, 3, 64, 64), DTYPE)  # NCHW RGB
    out = forward(params, x)
    out = jax.block_until_ready(out)
    assert out.shape == (2, 21, 64, 64), out.shape
    assert bool(jnp.all(jnp.isfinite(out)))
    print("KERNEL_OK")
</pallas_src>

<mosaic_0001>
module attributes {stable_mosaic.version = 11 : i64} {
  func.func @_mm_epilogue_kernel(%arg0: i32, %arg1: i32, %arg2: memref<512x27xbf16, #tpu.memory_space<vmem>>, %arg3: memref<27x128xbf16, #tpu.memory_space<vmem>>, %arg4: memref<1x128xf32, #tpu.memory_space<vmem>>, %arg5: memref<1x128xf32, #tpu.memory_space<vmem>>, %arg6: memref<1x128xf32, #tpu.memory_space<vmem>>, %arg7: memref<1x1x128xf32, #tpu.memory_space<vmem>>, %arg8: memref<512x128xbf16, #tpu.memory_space<vmem>>) attributes {dimension_semantics = [#tpu.dimension_semantics<parallel>, #tpu.dimension_semantics<parallel>], iteration_bounds = array<i64: 1, 4>, scalar_prefetch = 0 : i64, scratch_operands = 0 : i64, tpu.core_type = #tpu.core_type<tc>, window_params = [{transform_indices = @transform_0, window_bounds = array<i64: 512, 27>}, {pipeline_mode = #tpu.pipeline_mode<synchronous>, transform_indices = @transform_1, window_bounds = array<i64: 27, 128>}, {pipeline_mode = #tpu.pipeline_mode<synchronous>, transform_indices = @transform_2, window_bounds = array<i64: 1, 128>}, {pipeline_mode = #tpu.pipeline_mode<synchronous>, transform_indices = @transform_3, window_bounds = array<i64: 1, 128>}, {pipeline_mode = #tpu.pipeline_mode<synchronous>, transform_indices = @transform_4, window_bounds = array<i64: 1, 128>}, {transform_indices = @transform_5, window_bounds = array<i64: 1, 1, 128>}, {transform_indices = @transform_6, window_bounds = array<i64: 512, 128>}]} {
    %c0 = arith.constant 0 : index
    %c0_0 = arith.constant 0 : index
    %0 = vector.load %arg2[%c0, %c0_0] : memref<512x27xbf16, #tpu.memory_space<vmem>>, vector<512x27xbf16>
    %c0_1 = arith.constant 0 : index
    %c0_2 = arith.constant 0 : index
    %1 = vector.load %arg3[%c0_1, %c0_2] : memref<27x128xbf16, #tpu.memory_space<vmem>>, vector<27x128xbf16>
    %cst = arith.constant dense<0.000000e+00> : vector<512x128xf32>
    %2 = tpu.matmul %0, %1, %cst {dimension_numbers = #tpu.dot_dimension_numbers<[1], [0], [0], [1], [0, 0, 1, 1], [], []>} : vector<512x27xbf16>, vector<27x128xbf16>, vector<512x128xf32> -> vector<512x128xf32>
    %c0_3 = arith.constant 0 : index
    %c0_4 = arith.constant 0 : index
    %3 = vector.load %arg4[%c0_3, %c0_4] : memref<1x128xf32, #tpu.memory_space<vmem>>, vector<1x128xf32>
    %4 = vector.broadcast %3 : vector<1x128xf32> to vector<512x128xf32>
    %5 = arith.mulf %2, %4 : vector<512x128xf32>
    %c0_5 = arith.constant 0 : index
    %c0_6 = arith.constant 0 : index
    %6 = vector.load %arg5[%c0_5, %c0_6] : memref<1x128xf32, #tpu.memory_space<vmem>>, vector<1x128xf32>
    %7 = vector.broadcast %6 : vector<1x128xf32> to vector<512x128xf32>
    %8 = arith.addf %5, %7 : vector<512x128xf32>
    %cst_7 = arith.constant 0.000000e+00 : f32
    %9 = vector.broadcast %cst_7 : f32 to vector<512x128xf32>
    %10 = arith.cmpf ogt, %8, %9 : vector<512x128xf32>
    %c0_8 = arith.constant 0 : index
    %c0_9 = arith.constant 0 : index
    %11 = vector.load %arg6[%c0_8, %c0_9] : memref<1x128xf32, #tpu.memory_space<vmem>>, vector<1x128xf32>
    %12 = vector.broadcast %11 : vector<1x128xf32> to vector<512x128xf32>
    %13 = arith.mulf %8, %12 : vector<512x128xf32>
    %14 = arith.select %10, %8, %13 : vector<512x128xi1>, vector<512x128xf32>
    %c0_10 = arith.constant 0 : index
    %c0_11 = arith.constant 0 : index
    %c0_12 = arith.constant 0 : index
    %15 = vector.load %arg7[%c0_10, %c0_11, %c0_12] : memref<1x1x128xf32, #tpu.memory_space<vmem>>, vector<1x1x128xf32>
    %16 = vector.shape_cast %15 : vector<1x1x128xf32> to vector<1x128xf32>
    %17 = vector.broadcast %16 : vector<1x128xf32> to vector<512x128xf32>
    %18 = arith.mulf %14, %17 : vector<512x128xf32>
    %19 = arith.truncf %18 : vector<512x128xf32> to vector<512x128xbf16>
    %c0_13 = arith.constant 0 : index
    %c0_14 = arith.constant 0 : index
    %20 = vector.load %arg8[%c0_13, %c0_14] : memref<512x128xbf16, #tpu.memory_space<vmem>>, vector<512x128xbf16>
    tpu.vector_store %arg8[%c0_13, %c0_14], %19 {strides = array<i32>} : memref<512x128xbf16, #tpu.memory_space<vmem>>, vector<512x128xbf16>,
    return
  }
  func.func @transform_0(%arg0: i32, %arg1: i32) -> (i32, i32) {
    %c4_i32 = arith.constant 4 : i32
    %0 = arith.muli %arg0, %c4_i32 : i32
    %1 = arith.addi %0, %arg1 : i32
    %c0_i32 = arith.constant 0 : i32
    %c0_i32_0 = arith.constant 0 : i32
    return %1, %c0_i32 : i32, i32
  }
  func.func @transform_1(%arg0: i32, %arg1: i32) -> (i32, i32) {
    %c0_i32 = arith.constant 0 : i32
    %c0_i32_0 = arith.constant 0 : i32
    %c0_i32_1 = arith.constant 0 : i32
    return %c0_i32, %c0_i32_0 : i32, i32
  }
  func.func @transform_2(%arg0: i32, %arg1: i32) -> (i32, i32) {
    %c0_i32 = arith.constant 0 : i32
    %c0_i32_0 = arith.constant 0 : i32
    %c0_i32_1 = arith.constant 0 : i32
    return %c0_i32, %c0_i32_0 : i32, i32
  }
  func.func @transform_3(%arg0: i32, %arg1: i32) -> (i32, i32) {
    %c0_i32 = arith.constant 0 : i32
    %c0_i32_0 = arith.constant 0 : i32
    %c0_i32_1 = arith.constant 0 : i32
    return %c0_i32, %c0_i32_0 : i32, i32
  }
  func.func @transform_4(%arg0: i32, %arg1: i32) -> (i32, i32) {
    %c0_i32 = arith.constant 0 : i32
    %c0_i32_0 = arith.constant 0 : i32
    %c0_i32_1 = arith.constant 0 : i32
    return %c0_i32, %c0_i32_0 : i32, i32
  }
  func.func @transform_5(%arg0: i32, %arg1: i32) -> (i32, i32, i32) {
    %c0_i32 = arith.constant 0 : i32
    %c0_i32_0 = arith.constant 0 : i32
    %c0_i32_1 = arith.constant 0 : i32
    return %arg0, %c0_i32, %c0_i32_0 : i32, i32, i32
  }
  func.func @transform_6(%arg0: i32, %arg1: i32) -> (i32, i32) {
    %c4_i32 = arith.constant 4 : i32
    %0 = arith.muli %arg0, %c4_i32 : i32
    %1 = arith.addi %0, %arg1 : i32
    %c0_i32 = arith.constant 0 : i32
    %c0_i32_0 = arith.constant 0 : i32
    return %1, %c0_i32 : i32, i32
  }
}

</mosaic_0001>

<llo_original>
// kernel: tpu_custom_call.1
$region0: #{tpu_custom_call.1}
  #allocation0 [shape = 'u32[]', space=smem, size = 0x4, offset = 0x4, fixed_abs, tag = 'smem constant byte address 0x4 - core index']
  #allocation1 [shape = 'u32[144,128]{1,0:T(1,128)}', space=vmem, size = 0x12000, scoped, tag = 'internal scratch']
  %s0 = inlined_call_operand.vmem [shape: bf16[2048,27], index: 0, kind: input, shape index: {}]
  %s1 = inlined_call_operand.vmem [shape: bf16[27,128], index: 1, kind: input, shape index: {}]
  %s2 = inlined_call_operand.vmem [shape: f32[1,128], index: 2, kind: input, shape index: {}]
  %s3 = inlined_call_operand.vmem [shape: f32[1,128], index: 3, kind: input, shape index: {}]
  %s4 = inlined_call_operand.vmem [shape: f32[1,128], index: 4, kind: input, shape index: {}]
  %s5 = inlined_call_operand.vmem [shape: f32[1,1,128], index: 5, kind: input, shape index: {}]
  %s6 = inlined_call_operand.hbm [shape: bf16[2048,128], index: 6, kind: output, shape index: {}]
  %s7 = sld [smem:[#allocation0]]
  $region57: #{tpu_custom_call.1} parent=0
    _
  %s9 = ssub.s32 1, %s7
  %s10 = scalar_select 0, %s9, %s7
  $region1: #{tpu_custom_call.1} parent=0
    #allocation2 [shape = 'u8[262144]{0}', space=vmem, size = 0x40000, scoped, tag = 'output window, operand 0']
    #allocation3 [shape = 's32[2]{0}', space=sflag, size = 0x8, scoped, tag = 'scoped memory for tpu_custom_call.1']
    %11 = vsyncpa [#allocation3], 0
    %s12 = scalar_lea.sflag [#allocation3], 1
    %13 = vsyncpa %s12, 0
    loop: start=0, step=1, limit=6
    $region2: #{tpu_custom_call.1} parent=1 // loop_pre_header
      _
    $region3: #{tpu_custom_call.1} parent=1 // loop_header
      %s15 = sphi 0, %s19
      %p16 = scmp.ge.s32.totalorder %s15, 6
      %s22 = sphi 0, %s34
      %s23 = sphi 0, %s30
      %s24 = sphi 0, %s22
      %s25 = sphi 0, %s23
      %s26 = sphi 0, %s24
      %s27 = sphi 0, %s25
      %s41 = sphi 0, %s43
      %s44 = sphi 0, %s41
      %s45 = sphi 0, %s44
      %s61 = sphi 0, %s45
      %s65 = sphi 0, %s65
      %s67 = sphi 0, %s65
      %s68 = sphi 0, %s67
      %s82 = sphi 0, %s68
      %s86 = sphi 0, %s86
      %s88 = sphi 0, %s86
      %s89 = sphi 0, %s88
      %s103 = sphi 0, %s89
      %s107 = sphi 0, %s107
      %s109 = sphi 0, %s107
      %s110 = sphi 0, %s109
      %s124 = sphi 0, %s110
      %s128 = sphi 0, %s128
      %s130 = sphi 0, %s128
      %s131 = sphi 0, %s130
      %s145 = sphi 0, %s131
      %s151 = sphi 0, %s153
      %s154 = sphi 0, %s151
      %s155 = sphi 0, %s154
      %s171 = sphi 0, %s155
      %s181 = sphi 0, %s183
      %s184 = sphi 0, %s181
      %s185 = sphi 0, %s184
      %s201 = sphi 0, %s185
    $region4: #{tpu_custom_call.1} parent=1 // loop_header_branch
      %18 = sbr.rel (%p16) target = $region8
    $region5: #{tpu_custom_call.1} parent=1 // loop_body
      %s20 = ssub.s32 %s15, 1
      %s21 = ssub.s32 %s15, 2
      %s28 = sadd.s32 1, %s23
      %p29 = scmp.ge.s32.totalorder %s28, 4
      %s30 = scalar_select %p29, 0, %s28
      %s31 = sadd.s32 1, %s22
      %s32 = scalar_select %p29, %s31, %s22
      %p33 = scmp.ge.s32.totalorder %s32, 1
      %s34 = scalar_select %p33, 0, %s32
      %s35 = smul.u32 %s22, 4
      %s36 = sadd.s32 %s35, %s23
      %s37 = smul.u32 %s34, 4
      %s38 = sadd.s32 %s37, %s30
      %s39 = ssub.s32 %s36, %s38
      %p40 = scmp.eq.s32.totalorder %s39, 0
      %s42 = sadd.s32 %s41, 1
      %s43 = scalar_select %p40, %s41, %s42
      %p46 = pneg %p40
      %p47 = scmp.eq.s32.totalorder %s15, 3
      %p48 = por %p46, %p47
      %p49 = scmp.ne.s32.totalorder %s41, %s44
      %p50 = scmp.eq.s32.totalorder %s15, 0
      %p51 = por %p49, %p50
      %p52 = scmp.ne.s32.totalorder %s41, %s44
      %p53 = scmp.eq.s32.totalorder %s20, 3
      %p54 = por %p52, %p53
      %p55 = scmp.ne.s32.totalorder %s44, %s45
      %p56 = scmp.eq.s32.totalorder %s20, 0
      %p57 = por %p55, %p56
      %p58 = scmp.ne.s32.totalorder %s44, %s45
      %p59 = scmp.eq.s32.totalorder %s21, 3
      %p60 = por %p58, %p59
      %p62 = scmp.ne.s32.totalorder %s45, %s61
      %p63 = scmp.eq.s32.totalorder %s21, 0
      %p64 = por %p62, %p63
      %s66 = sadd.s32 %s65, 1
      %p69 = scmp.eq.s32.totalorder %s15, 3
      %p70 = scmp.ne.s32.totalorder %s65, %s67
      %p71 = scmp.eq.s32.totalorder %s15, 0
      %p72 = por %p70, %p71
      %p73 = scmp.ne.s32.totalorder %s65, %s67
      %p74 = scmp.eq.s32.totalorder %s20, 3
      %p75 = por %p73, %p74
      %p76 = scmp.ne.s32.totalorder %s67, %s68
      %p77 = scmp.eq.s32.totalorder %s20, 0
      %p78 = por %p76, %p77
      %p79 = scmp.ne.s32.totalorder %s67, %s68
      %p80 = scmp.eq.s32.totalorder %s21, 3
      %p81 = por %p79, %p80
      %p83 = scmp.ne.s32.totalorder %s68, %s82
      %p84 = scmp.eq.s32.totalorder %s21, 0
      %p85 = por %p83, %p84
      %s87 = sadd.s32 %s86, 1
      %p90 = scmp.eq.s32.totalorder %s15, 3
      %p91 = scmp.ne.s32.totalorder %s86, %s88
      %p92 = scmp.eq.s32.totalorder %s15, 0
      %p93 = por %p91, %p92
      %p94 = scmp.ne.s32.totalorder %s86, %s88
      %p95 = scmp.eq.s32.totalorder %s20, 3
      %p96 = por %p94, %p95
      %p97 = scmp.ne.s32.totalorder %s88, %s89
      %p98 = scmp.eq.s32.totalorder %s20, 0
      %p99 = por %p97, %p98
      %p100 = scmp.ne.s32.totalorder %s88, %s89
      %p101 = scmp.eq.s32.totalorder %s21, 3
      %p102 = por %p100, %p101
      %p104 = scmp.ne.s32.totalorder %s89, %s103
      %p105 = scmp.eq.s32.totalorder %s21, 0
      %p106 = por %p104, %p105
      %s108 = sadd.s32 %s107, 1
      %p111 = scmp.eq.s32.totalorder %s15, 3
      %p112 = scmp.ne.s32.totalorder %s107, %s109
      %p113 = scmp.eq.s32.totalorder %s15, 0
      %p114 = por %p112, %p113
      %p115 = scmp.ne.s32.totalorder %s107, %s109
      %p116 = scmp.eq.s32.totalorder %s20, 3
      %p117 = por %p115, %p116
      %p118 = scmp.ne.s32.totalorder %s109, %s110
      %p119 = scmp.eq.s32.totalorder %s20, 0
      %p120 = por %p118, %p119
      %p121 = scmp.ne.s32.totalorder %s109, %s110
      %p122 = scmp.eq.s32.totalorder %s21, 3
      %p123 = por %p121, %p122
      %p125 = scmp.ne.s32.totalorder %s110, %s124
      %p126 = scmp.eq.s32.totalorder %s21, 0
      %p127 = por %p125, %p126
      %s129 = sadd.s32 %s128, 1
      %p132 = scmp.eq.s32.totalorder %s15, 3
      %p133 = scmp.ne.s32.totalorder %s128, %s130
      %p134 = scmp.eq.s32.totalorder %s15, 0
      %p135 = por %p133, %p134
      %p136 = scmp.ne.s32.totalorder %s128, %s130
      %p137 = scmp.eq.s32.totalorder %s20, 3
      %p138 = por %p136, %p137
      %p139 = scmp.ne.s32.totalorder %s130, %s131
      %p140 = scmp.eq.s32.totalorder %s20, 0
      %p141 = por %p139, %p140
      %p142 = scmp.ne.s32.totalorder %s130, %s131
      %p143 = scmp.eq.s32.totalorder %s21, 3
      %p144 = por %p142, %p143
      %p146 = scmp.ne.s32.totalorder %s131, %s145
      %p147 = scmp.eq.s32.totalorder %s21, 0
      %p148 = por %p146, %p147
      %s149 = ssub.s32 %s22, %s34
      %p150 = scmp.eq.s32.totalorder %s149, 0
      %s152 = sadd.s32 %s151, 1
      %s153 = scalar_select %p150, %s151, %s152
      %p156 = pneg %p150
      %p157 = scmp.eq.s32.totalorder %s15, 3
      %p158 = por %p156, %p157
      %p159 = scmp.ne.s32.totalorder %s151, %s154
      %p160 = scmp.eq.s32.totalorder %s15, 0
      %p161 = por %p159, %p160
      %p162 = scmp.ne.s32.totalorder %s151, %s154
      %p163 = scmp.eq.s32.totalorder %s20, 3
      %p164 = por %p162, %p163
      %p165 = scmp.ne.s32.totalorder %s154, %s155
      %p166 = scmp.eq.s32.totalorder %s20, 0
      %p167 = por %p165, %p166
      %p168 = scmp.ne.s32.totalorder %s154, %s155
      %p169 = scmp.eq.s32.totalorder %s21, 3
      %p170 = por %p168, %p169
      %p172 = scmp.ne.s32.totalorder %s155, %s171
      %p173 = scmp.eq.s32.totalorder %s21, 0
      %p174 = por %p172, %p173
      %s175 = smul.u32 %s22, 4
      %s176 = sadd.s32 %s175, %s23
      %s177 = smul.u32 %s34, 4
      %s178 = sadd.s32 %s177, %s30
      %s179 = ssub.s32 %s176, %s178
      %p180 = scmp.eq.s32.totalorder %s179, 0
      %s182 = sadd.s32 %s181, 1
      %s183 = scalar_select %p180, %s181, %s182
      %p186 = pneg %p180
      %p187 = scmp.eq.s32.totalorder %s15, 3
      %p188 = por %p186, %p187
      %p189 = scmp.ne.s32.totalorder %s181, %s184
      %p190 = scmp.eq.s32.totalorder %s15, 0
      %p191 = por %p189, %p190
      %p192 = scmp.ne.s32.totalorder %s181, %s184
      %p193 = scmp.eq.s32.totalorder %s20, 3
      %p194 = por %p192, %p193
      %p195 = scmp.ne.s32.totalorder %s184, %s185
      %p196 = scmp.eq.s32.totalorder %s20, 0
      %p197 = por %p195, %p196
      %p198 = scmp.ne.s32.totalorder %s184, %s185
      %p199 = scmp.eq.s32.totalorder %s21, 3
      %p200 = por %p198, %p199
      %p202 = scmp.ne.s32.totalorder %s185, %s201
      %p203 = scmp.eq.s32.totalorder %s21, 0
      %p204 = por %p202, %p203
      %p205 = scmp.le.s32.totalorder 1, %s15
      %p206 = scmp.lt.s32.totalorder %s15, 5
      %p207 = pnand %p205, %p206
      %p208 = pneg %p207
      // Predicated region
      $region9: #{tpu_custom_call.1} parent=5 // pred_check
        _
      $region10: #{tpu_custom_call.1} parent=5 // pred_check_branch
        %210 = sbr.rel (%p207) target = $region12
      $region11: #{tpu_custom_call.1} parent=5 // pred_region
        %s211 = ssub.s32 %s15, 1
        // Predicated region
        $region13: #{tpu_custom_call.1} parent=11 // pred_check
          %p212 = pneg %p78
        $region14: #{tpu_custom_call.1} parent=11 // pred_check_branch
          %214 = sbr.rel (%p212) target = $region16
        $region15: #{tpu_custom_call.1} parent=11 // pred_region
          _
        $region16: #{tpu_custom_call.1} parent=11 // pred_fallthru
          _
        // Predicated region
        $region17: #{tpu_custom_call.1} parent=11 // pred_check
          %p215 = pneg %p99
        $region18: #{tpu_custom_call.1} parent=11 // pred_check_branch
          %217 = sbr.rel (%p215) target = $region20
        $region19: #{tpu_custom_call.1} parent=11 // pred_region
          _
        $region20: #{tpu_custom_call.1} parent=11 // pred_fallthru
          _
        // Predicated region
        $region21: #{tpu_custom_call.1} parent=11 // pred_check
          %p218 = pneg %p120
        $region22: #{tpu_custom_call.1} parent=11 // pred_check_branch
          %220 = sbr.rel (%p218) target = $region24
        $region23: #{tpu_custom_call.1} parent=11 // pred_region
          _
        $region24: #{tpu_custom_call.1} parent=11 // pred_fallthru
          _
        // Predicated region
        $region25: #{tpu_custom_call.1} parent=11 // pred_check
          %p221 = pneg %p141
        $region26: #{tpu_custom_call.1} parent=11 // pred_check_branch
          %223 = sbr.rel (%p221) target = $region28
        $region27: #{tpu_custom_call.1} parent=11 // pred_region
          _
        $region28: #{tpu_custom_call.1} parent=11 // pred_fallthru
          _
        // Predicated region
        $region29: #{tpu_custom_call.1} parent=11 // pred_check
          %p224 = pneg %p167
        $region30: #{tpu_custom_call.1} parent=11 // pred_check_branch
          %226 = sbr.rel (%p224) target = $region32
        $region31: #{tpu_custom_call.1} parent=11 // pred_region
          %p227 = scmp.lt.s32.totalorder %s24, 0
          %s228 = scalar_select %p227, %s24, 0
          %s229 = scalar_lea.vmem %s5, %s228
        $region32: #{tpu_custom_call.1} parent=11 // pred_fallthru
          _
      $region12: #{tpu_custom_call.1} parent=5 // pred_fallthru
        _
      %p230 = scmp.lt.s32.totalorder %s15, 4
      // Predicated region
      $region33: #{tpu_custom_call.1} parent=5 // pred_check
        %p231 = pneg %p230
      $region34: #{tpu_custom_call.1} parent=5 // pred_check_branch
        %233 = sbr.rel (%p231) target = $region36
      $region35: #{tpu_custom_call.1} parent=5 // pred_region
        // Predicated region
        $region37: #{tpu_custom_call.1} parent=35 // pred_check
          %p234 = pneg %p51
        $region38: #{tpu_custom_call.1} parent=35 // pred_check_branch
          %236 = sbr.rel (%p234) target = $region40
        $region39: #{tpu_custom_call.1} parent=35 // pred_region
          %s237 = smul.u32 %s22, 4
          %s238 = sadd.s32 %s237, %s23
          %s239 = smul.u32 64, %s238
          %p240 = scmp.lt.s32.totalorder %s239, 255
          %s241 = scalar_select %p240, %s239, 255
          %s242 = smul.addr %s241, 4
          %s243 = scalar_lea.vmem %s0, %s242
          %s244 = smul.u32 %s22, 4
          %s245 = sadd.s32 %s244, %s23
          %s246 = smul.u32 64, %s245
        $region40: #{tpu_custom_call.1} parent=35 // pred_fallthru
          _
      $region36: #{tpu_custom_call.1} parent=5 // pred_fallthru
        _
      %p247 = scmp.le.s32.totalorder 1, %s15
      %p248 = scmp.lt.s32.totalorder %s15, 5
      %p249 = pnand %p247, %p248
      %p250 = pneg %p249
      // Predicated region
      $region41: #{tpu_custom_call.1} parent=5 // pred_check
        _
      $region42: #{tpu_custom_call.1} parent=5 // pred_check_branch
        %252 = sbr.rel (%p249) target = $region44
      $region43: #{tpu_custom_call.1} parent=5 // pred_region
        %s253 = ssub.s32 %s15, 1
        %s254 = smul.u32 %s24, 4
        %s255 = sadd.s32 %s254, %s25
        %s256 = smul.u32 64, %s255
        %p257 = scmp.lt.s32.totalorder %s256, 255
        %s258 = scalar_select %p257, %s256, 255
        %s259 = smul.addr %s258, 4
        %s260 = scalar_lea.vmem %s0, %s259
        %p261 = pneg %p57
        %p262 = pneg %p54
        %p263 = pneg %p78
        %p264 = pneg %p75
        %p265 = pneg %p99
        %p266 = pneg %p96
        %p267 = pneg %p120
        %p268 = pneg %p117
        %p269 = pneg %p141
        %p270 = pneg %p138
        %p271 = scmp.lt.s32.totalorder %s24, 0
        %s272 = scalar_select %p271, %s24, 0
        %s273 = scalar_lea.vmem %s5, %s272
        %p274 = pneg %p167
        %p275 = pneg %p164
        %p276 = pneg %p197
        %p277 = pneg %p194
        %s278 = sand.u32 %s184, 1
        %s279 = scalar_lea.sflag [#allocation3], %s278
        %s280 = sand.u32 %s184, 1
        %s281 = smul.addr %s280, 256
        %s282 = scalar_lea.vmem [#allocation2], %s281
        %s283 = smul.u32 %s24, 4
        %s284 = sadd.s32 %s283, %s25
        %s285 = smul.u32 64, %s284
        %p286 = scmp.lt.s32.totalorder %s285, 255
        %s287 = scalar_select %p286, %s285, 255
        %s288 = smul.addr %s287, 4
        %s289 = scalar_lea.vmem %s0, %s288
        %s290 = smul.u32 %s24, 4
        %s291 = sadd.s32 %s290, %s25
        %s292 = smul.u32 64, %s291
        %p293 = scmp.lt.s32.totalorder %s24, 0
        %s294 = scalar_select %p293, %s24, 0
        %s295 = scalar_lea.vmem %s5, %s294
        %s296 = smul.u32 %s24, 4
        %s297 = sadd.s32 %s296, %s25
        %s298 = smul.u32 64, %s297
        %v300 = vld [vmem:[%s289] sm:$0xf]
        %v301 = vld [vmem:[%s289 + $0x4] sm:$0xf]
        %v302 = vld [vmem:[%s289 + $0x8] sm:$0xf]
        %v303 = vld [vmem:[%s289 + $0xc] sm:$0xf]
        %v304 = vld [vmem:[%s289 + $0x10] sm:$0xf]
        %v305 = vld [vmem:[%s289 + $0x14] sm:$0xf]
        %v306 = vld [vmem:[%s289 + $0x18] sm:$0xf]
        %v307 = vld [vmem:[%s289 + $0x1c] sm:$0xf]
        %v308 = vld [vmem:[%s289 + $0x20] sm:$0xf]
        %v309 = vld [vmem:[%s289 + $0x24] sm:$0xf]
        %v310 = vld [vmem:[%s289 + $0x28] sm:$0xf]
        %v311 = vld [vmem:[%s289 + $0x2c] sm:$0xf]
        %v312 = vld [vmem:[%s289 + $0x30] sm:$0xf]
        %v313 = vld [vmem:[%s289 + $0x34] sm:$0xf]
        %v314 = vld [vmem:[%s289 + $0x38] sm:$0xf]
        %v315 = vld [vmem:[%s289 + $0x3c] sm:$0xf]
        %v316 = vld [vmem:[%s289 + $0x40] sm:$0xf]
        %v317 = vld [vmem:[%s289 + $0x44] sm:$0xf]
        %v318 = vld [vmem:[%s289 + $0x48] sm:$0xf]
        %v319 = vld [vmem:[%s289 + $0x4c] sm:$0xf]
        %v320 = vld [vmem:[%s289 + $0x50] sm:$0xf]
        %v321 = vld [vmem:[%s289 + $0x54] sm:$0xf]
        %v322 = vld [vmem:[%s289 + $0x58] sm:$0xf]
        %v323 = vld [vmem:[%s289 + $0x5c] sm:$0xf]
        %v324 = vld [vmem:[%s289 + $0x60] sm:$0xf]
        %v325 = vld [vmem:[%s289 + $0x64] sm:$0xf]
        %v326 = vld [vmem:[%s289 + $0x68] sm:$0xf]
        %v327 = vld [vmem:[%s289 + $0x6c] sm:$0xf]
        %v328 = vld [vmem:[%s289 + $0x70] sm:$0xf]
        %v329 = vld [vmem:[%s289 + $0x74] sm:$0xf]
        %v330 = vld [vmem:[%s289 + $0x78] sm:$0xf]
        %v331 = vld [vmem:[%s289 + $0x7c] sm:$0xf]
        %v332 = vld [vmem:[%s289 + $0x80] sm:$0xf]
        %v333 = vld [vmem:[%s289 + $0x84] sm:$0xf]
        %v334 = vld [vmem:[%s289 + $0x88] sm:$0xf]
        %v335 = vld [vmem:[%s289 + $0x8c] sm:$0xf]
        %v336 = vld [vmem:[%s289 + $0x90] sm:$0xf]
        %v337 = vld [vmem:[%s289 + $0x94] sm:$0xf]
        %v338 = vld [vmem:[%s289 + $0x98] sm:$0xf]
        %v339 = vld [vmem:[%s289 + $0x9c] sm:$0xf]
        %v340 = vld [vmem:[%s289 + $0xa0] sm:$0xf]
        %v341 = vld [vmem:[%s289 + $0xa4] sm:$0xf]
        %v342 = vld [vmem:[%s289 + $0xa8] sm:$0xf]
        %v343 = vld [vmem:[%s289 + $0xac] sm:$0xf]
        %v344 = vld [vmem:[%s289 + $0xb0] sm:$0xf]
        %v345 = vld [vmem:[%s289 + $0xb4] sm:$0xf]
        %v346 = vld [vmem:[%s289 + $0xb8] sm:$0xf]
        %v347 = vld [vmem:[%s289 + $0xbc] sm:$0xf]
        %v348 = vld [vmem:[%s289 + $0xc0] sm:$0xf]
        %v349 = vld [vmem:[%s289 + $0xc4] sm:$0xf]
        %v350 = vld [vmem:[%s289 + $0xc8] sm:$0xf]
        %v351 = vld [vmem:[%s289 + $0xcc] sm:$0xf]
        %v352 = vld [vmem:[%s289 + $0xd0] sm:$0xf]
        %v353 = vld [vmem:[%s289 + $0xd4] sm:$0xf]
        %v354 = vld [vmem:[%s289 + $0xd8] sm:$0xf]
        %v355 = vld [vmem:[%s289 + $0xdc] sm:$0xf]
        %v356 = vld [vmem:[%s289 + $0xe0] sm:$0xf]
        %v357 = vld [vmem:[%s289 + $0xe4] sm:$0xf]
        %v358 = vld [vmem:[%s289 + $0xe8] sm:$0xf]
        %v359 = vld [vmem:[%s289 + $0xec] sm:$0xf]
        %v360 = vld [vmem:[%s289 + $0xf0] sm:$0xf]
        %v361 = vld [vmem:[%s289 + $0xf4] sm:$0xf]
        %v362 = vld [vmem:[%s289 + $0xf8] sm:$0xf]
        %v363 = vld [vmem:[%s289 + $0xfc] sm:$0xf]
        %v364 = vld [vmem:[%s1] sm:$0xf]
        %v365 = vld [vmem:[%s1 + $0x4] sm:$0xf]
        %v366 = vld [vmem:[%s1 + $0x8] sm:$0xf]
        %v367 = vld [vmem:[%s1 + $0xc] sm:$0x3]
        %v432 = vunpack.c.l.b16 %v300
        %v433 = vunpack.c.l.b16 %v301
        %v434 = vunpack.c.l.b16 %v302
        %v435 = vunpack.c.l.b16 %v303
        %v436 = vunpack.c.l.b16 %v304
        %v437 = vunpack.c.l.b16 %v305
        %v438 = vunpack.c.l.b16 %v306
        %v439 = vunpack.c.l.b16 %v307
        %v440 = vunpack.c.l.b16 %v308
        %v441 = vunpack.c.l.b16 %v309
        %v442 = vunpack.c.l.b16 %v310
        %v443 = vunpack.c.l.b16 %v311
        %v444 = vunpack.c.l.b16 %v312
        %v445 = vunpack.c.l.b16 %v313
        %v446 = vunpack.c.l.b16 %v314
        %v447 = vunpack.c.l.b16 %v315
        %v448 = vunpack.c.l.b16 %v316
        %v449 = vunpack.c.l.b16 %v317
        %v450 = vunpack.c.l.b16 %v318
        %v451 = vunpack.c.l.b16 %v319
        %v452 = vunpack.c.l.b16 %v320
        %v453 = vunpack.c.l.b16 %v321
        %v454 = vunpack.c.l.b16 %v322
        %v455 = vunpack.c.l.b16 %v323
        %v456 = vunpack.c.l.b16 %v324
        %v457 = vunpack.c.l.b16 %v325
        %v458 = vunpack.c.l.b16 %v326
        %v459 = vunpack.c.l.b16 %v327
        %v460 = vunpack.c.l.b16 %v328
        %v461 = vunpack.c.l.b16 %v329
        %v462 = vunpack.c.l.b16 %v330
        %v463 = vunpack.c.l.b16 %v331
        %v464 = vunpack.c.l.b16 %v332
        %v465 = vunpack.c.l.b16 %v333
        %v466 = vunpack.c.l.b16 %v334
        %v467 = vunpack.c.l.b16 %v335
        %v468 = vunpack.c.l.b16 %v336
        %v469 = vunpack.c.l.b16 %v337
        %v470 = vunpack.c.l.b16 %v338
        %v471 = vunpack.c.l.b16 %v339
        %v472 = vunpack.c.l.b16 %v340
        %v473 = vunpack.c.l.b16 %v341
        %v474 = vunpack.c.l.b16 %v342
        %v475 = vunpack.c.l.b16 %v343
        %v476 = vunpack.c.l.b16 %v344
        %v477 = vunpack.c.l.b16 %v345
        %v478 = vunpack.c.l.b16 %v346
        %v479 = vunpack.c.l.b16 %v347
        %v480 = vunpack.c.l.b16 %v348
        %v481 = vunpack.c.l.b16 %v349
        %v482 = vunpack.c.l.b16 %v350
        %v483 = vunpack.c.l.b16 %v351
        %v484 = vunpack.c.l.b16 %v352
        %v485 = vunpack.c.l.b16 %v353
        %v486 = vunpack.c.l.b16 %v354
        %v487 = vunpack.c.l.b16 %v355
        %v488 = vunpack.c.l.b16 %v356
        %v489 = vunpack.c.l.b16 %v357
        %v490 = vunpack.c.l.b16 %v358
        %v491 = vunpack.c.l.b16 %v359
        %v492 = vunpack.c.l.b16 %v360
        %v493 = vunpack.c.l.b16 %v361
        %v494 = vunpack.c.l.b16 %v362
        %v495 = vunpack.c.l.b16 %v363
        %v496 = vpack.c.b16 %v433, %v432
        %v497 = vpack.c.b16 %v435, %v434
        %v498 = vpack.c.b16 %v437, %v436
        %v499 = vpack.c.b16 %v439, %v438
        %v500 = vpack.c.b16 %v441, %v440
        %v501 = vpack.c.b16 %v443, %v442
        %v502 = vpack.c.b16 %v445, %v444
        %v503 = vpack.c.b16 %v447, %v446
        %v504 = vpack.c.b16 %v449, %v448
        %v505 = vpack.c.b16 %v451, %v450
        %v506 = vpack.c.b16 %v453, %v452
        %v507 = vpack.c.b16 %v455, %v454
        %v508 = vpack.c.b16 %v457, %v456
        %v509 = vpack.c.b16 %v459, %v458
        %v510 = vpack.c.b16 %v461, %v460
        %v511 = vpack.c.b16 %v463, %v462
        %v512 = vpack.c.b16 %v465, %v464
        %v513 = vpack.c.b16 %v467, %v466
        %v514 = vpack.c.b16 %v469, %v468
        %v515 = vpack.c.b16 %v471, %v470
        %v516 = vpack.c.b16 %v473, %v472
        %v517 = vpack.c.b16 %v475, %v474
        %v518 = vpack.c.b16 %v477, %v476
        %v519 = vpack.c.b16 %v479, %v478
        %v520 = vpack.c.b16 %v481, %v480
        %v521 = vpack.c.b16 %v483, %v482
        %v522 = vpack.c.b16 %v485, %v484
        %v523 = vpack.c.b16 %v487, %v486
        %v524 = vpack.c.b16 %v489, %v488
        %v525 = vpack.c.b16 %v491, %v490
        %v526 = vpack.c.b16 %v493, %v492
        %v527 = vpack.c.b16 %v495, %v494
        %v532 = vunpack.c.l.b16 %v364
        %v533 = vunpack.c.l.b16 %v365
        %v534 = vunpack.c.l.b16 %v366
        %v535 = vunpack.c.l.b16 %v367
        %v536 = vpack.c.b16 %v533, %v532
        %v537 = vpack.c.b16 %v535, %v534
        %vm539 = vcmask 220160
        %v541 = vsel %vm539, %v496, 0
        %v544 = vsel %vm539, %v497, 0
        %v547 = vsel %vm539, %v498, 0
        %v550 = vsel %vm539, %v499, 0
        %v553 = vsel %vm539, %v500, 0
        %v556 = vsel %vm539, %v501, 0
        %v559 = vsel %vm539, %v502, 0
        %v562 = vsel %vm539, %v503, 0
        %v565 = vsel %vm539, %v504, 0
        %v568 = vsel %vm539, %v505, 0
        %v571 = vsel %vm539, %v506, 0
        %v574 = vsel %vm539, %v507, 0
        %v577 = vsel %vm539, %v508, 0
        %v580 = vsel %vm539, %v509, 0
        %v583 = vsel %vm539, %v510, 0
        %v586 = vsel %vm539, %v511, 0
        %v589 = vsel %vm539, %v512, 0
        %v592 = vsel %vm539, %v513, 0
        %v595 = vsel %vm539, %v514, 0
        %v598 = vsel %vm539, %v515, 0
        %v601 = vsel %vm539, %v516, 0
        %v604 = vsel %vm539, %v517, 0
        %v607 = vsel %vm539, %v518, 0
        %v610 = vsel %vm539, %v519, 0
        %v613 = vsel %vm539, %v520, 0
        %v616 = vsel %vm539, %v521, 0
        %v619 = vsel %vm539, %v522, 0
        %v622 = vsel %vm539, %v523, 0
        %v625 = vsel %vm539, %v524, 0
        %v628 = vsel %vm539, %v525, 0
        %v631 = vsel %vm539, %v526, 0
        %v634 = vsel %vm539, %v527, 0
        %vm636 = vcmask 1044480
        %vm637 = vcmask 1045504
        %v638 = vsel %vm636, 4294967295, 65535
        %v639 = vsel %vm637, %v638, 0
        %v641 = vand.u32 %v537, %v639
        %643 = vmatprep.subr.bf16.mxu0 0
        %644 = vmatpush1.bf16.msra.mxu0 0
        %645 = vmatprep.subr.bf16.mxu0 0
        %646 = vmatpush1.bf16.msra.mxu0 0
        %647 = vmatprep.subr.bf16.mxu0 0
        %648 = vmatpush1.bf16.msra.mxu0 0
        %649 = vmatprep.subr.bf16.mxu0 0
        %650 = vmatpush1.bf16.msra.mxu0 0
        %651 = vmatprep.subr.bf16.mxu0 0
        %652 = vmatpush1.bf16.msra.mxu0 0
        %653 = vmatprep.subr.bf16.mxu0 0
        %654 = vmatpush1.bf16.msra.mxu0 0
        %655 = vmatprep.subr.bf16.mxu0 0
        %656 = vmatpush1.bf16.msra.mxu0 %v641
        %657 = vmatprep.subr.bf16.mxu0 0
        %658 = vmatpush1.bf16.msra.mxu0 %v536
        %659 = vmatprep.subr.bf16.mxu0 0
        %660 = vmatpush2.bf16.msra.mxu0 0
        %661 = vmatprep.subr.bf16.mxu0 0
        %662 = vmatpush2.bf16.msra.mxu0 0
        %663 = vmatprep.subr.bf16.mxu0 0
        %664 = vmatpush2.bf16.msra.mxu0 0
        %665 = vmatprep.subr.bf16.mxu0 0
        %666 = vmatpush2.bf16.msra.mxu0 0
        %667 = vmatprep.subr.bf16.mxu0 0
        %668 = vmatpush2.bf16.msra.mxu0 0
        %669 = vmatprep.subr.bf16.mxu0 0
        %670 = vmatpush2.bf16.msra.mxu0 0
        %671 = vmatprep.subr.bf16.mxu0 0
        %672 = vmatpush2.bf16.msra.mxu0 0
        %673 = vmatprep.subr.bf16.mxu0 0
        %674 = vmatpush2.bf16.msra.mxu0 0
        %675 = vmatprep.mubr.bf16.mxu0 0
        %676 = vmatmul.mubr.bf16.gmra.mxu0 %v541
        %v677 = vpop.f32.mrf.mxu0
        %v678 = vadd.f32 0.0, %v677
        %v679 = vpop.f32.mrf.mxu0
        %v680 = vpop.f32.mrf.mxu0
        %v681 = vadd.f32 0.0, %v680
        %v682 = vpop.f32.mrf.mxu0
        %683 = vmatprep.mubr.bf16.mxu0 0
        %684 = vmatmul.mubr.bf16.gmra.mxu0 %v544
        %v685 = vpop.f32.mrf.mxu0
        %v686 = vadd.f32 0.0, %v685
        %v687 = vpop.f32.mrf.mxu0
        %v688 = vpop.f32.mrf.mxu0
        %v689 = vadd.f32 0.0, %v688
        %v690 = vpop.f32.mrf.mxu0
        %691 = vmatprep.mubr.bf16.mxu0 0
        %692 = vmatmul.mubr.bf16.gmra.mxu0 %v547
        %v693 = vpop.f32.mrf.mxu0
        %v694 = vadd.f32 0.0, %v693
        %v695 = vpop.f32.mrf.mxu0
        %v696 = vpop.f32.mrf.mxu0
        %v697 = vadd.f32 0.0, %v696
        %v698 = vpop.f32.mrf.mxu0
        %699 = vmatprep.mubr.bf16.mxu0 0
        %700 = vmatmul.mubr.bf16.gmra.mxu0 %v550
        %v701 = vpop.f32.mrf.mxu0
        %v702 = vadd.f32 0.0, %v701
        %v703 = vpop.f32.mrf.mxu0
        %v704 = vpop.f32.mrf.mxu0
        %v705 = vadd.f32 0.0, %v704
        %v706 = vpop.f32.mrf.mxu0
        %707 = vmatprep.mubr.bf16.mxu0 0
        %708 = vmatmul.mubr.bf16.gmra.mxu0 %v553
        %v709 = vpop.f32.mrf.mxu0
        %v710 = vadd.f32 0.0, %v709
        %v711 = vpop.f32.mrf.mxu0
        %v712 = vpop.f32.mrf.mxu0
        %v713 = vadd.f32 0.0, %v712
        %v714 = vpop.f32.mrf.mxu0
        %715 = vmatprep.mubr.bf16.mxu0 0
        %716 = vmatmul.mubr.bf16.gmra.mxu0 %v556
        %v717 = vpop.f32.mrf.mxu0
        %v718 = vadd.f32 0.0, %v717
        %v719 = vpop.f32.mrf.mxu0
        %v720 = vpop.f32.mrf.mxu0
        %v721 = vadd.f32 0.0, %v720
        %v722 = vpop.f32.mrf.mxu0
        %723 = vmatprep.mubr.bf16.mxu0 0
        %724 = vmatmul.mubr.bf16.gmra.mxu0 %v559
        %v725 = vpop.f32.mrf.mxu0
        %v726 = vadd.f32 0.0, %v725
        %v727 = vpop.f32.mrf.mxu0
        %v728 = vpop.f32.mrf.mxu0
        %v729 = vadd.f32 0.0, %v728
        %v730 = vpop.f32.mrf.mxu0
        %731 = vmatprep.mubr.bf16.mxu0 0
        %732 = vmatmul.mubr.bf16.gmra.mxu0 %v562
        %v733 = vpop.f32.mrf.mxu0
        %v734 = vadd.f32 0.0, %v733
        %v735 = vpop.f32.mrf.mxu0
        %v736 = vpop.f32.mrf.mxu0
        %v737 = vadd.f32 0.0, %v736
        %v738 = vpop.f32.mrf.mxu0
        %739 = vmatprep.mubr.bf16.mxu0 0
        %740 = vmatmul.mubr.bf16.gmra.mxu0 %v565
        %v741 = vpop.f32.mrf.mxu0
        %v742 = vadd.f32 0.0, %v741
        %v743 = vpop.f32.mrf.mxu0
        %v744 = vpop.f32.mrf.mxu0
        %v745 = vadd.f32 0.0, %v744
        %v746 = vpop.f32.mrf.mxu0
        %747 = vmatprep.mubr.bf16.mxu0 0
        %748 = vmatmul.mubr.bf16.gmra.mxu0 %v568
        %v749 = vpop.f32.mrf.mxu0
        %v750 = vadd.f32 0.0, %v749
        %v751 = vpop.f32.mrf.mxu0
        %v752 = vpop.f32.mrf.mxu0
        %v753 = vadd.f32 0.0, %v752
        %v754 = vpop.f32.mrf.mxu0
        %755 = vmatprep.mubr.bf16.mxu0 0
        %756 = vmatmul.mubr.bf16.gmra.mxu0 %v571
        %v757 = vpop.f32.mrf.mxu0
        %v758 = vadd.f32 0.0, %v757
        %v759 = vpop.f32.mrf.mxu0
        %v760 = vpop.f32.mrf.mxu0
        %v761 = vadd.f32 0.0, %v760
        %v762 = vpop.f32.mrf.mxu0
        %763 = vmatprep.mubr.bf16.mxu0 0
        %764 = vmatmul.mubr.bf16.gmra.mxu0 %v574
        %v765 = vpop.f32.mrf.mxu0
        %v766 = vadd.f32 0.0, %v765
        %v767 = vpop.f32.mrf.mxu0
        %v768 = vpop.f32.mrf.mxu0
        %v769 = vadd.f32 0.0, %v768
        %v770 = vpop.f32.mrf.mxu0
        %771 = vmatprep.mubr.bf16.mxu0 0
        %772 = vmatmul.mubr.bf16.gmra.mxu0 %v577
        %v773 = vpop.f32.mrf.mxu0
        %v774 = vadd.f32 0.0, %v773
        %v775 = vpop.f32.mrf.mxu0
        %v776 = vpop.f32.mrf.mxu0
        %v777 = vadd.f32 0.0, %v776
        %v778 = vpop.f32.mrf.mxu0
        %779 = vmatprep.mubr.bf16.mxu0 0
        %780 = vmatmul.mubr.bf16.gmra.mxu0 %v580
        %v781 = vpop.f32.mrf.mxu0
        %v782 = vadd.f32 0.0, %v781
        %v783 = vpop.f32.mrf.mxu0
        %v784 = vpop.f32.mrf.mxu0
        %v785 = vadd.f32 0.0, %v784
        %v786 = vpop.f32.mrf.mxu0
        %787 = vmatprep.mubr.bf16.mxu0 0
        %788 = vmatmul.mubr.bf16.gmra.mxu0 %v583
        %v789 = vpop.f32.mrf.mxu0
        %v790 = vadd.f32 0.0, %v789
        %v791 = vpop.f32.mrf.mxu0
        %v792 = vpop.f32.mrf.mxu0
        %v793 = vadd.f32 0.0, %v792
        %v794 = vpop.f32.mrf.mxu0
        %795 = vmatprep.mubr.bf16.mxu0 0
        %796 = vmatmul.mubr.bf16.gmra.mxu0 %v586
        %v797 = vpop.f32.mrf.mxu0
        %v798 = vadd.f32 0.0, %v797
        %v799 = vpop.f32.mrf.mxu0
        %v800 = vpop.f32.mrf.mxu0
        %v801 = vadd.f32 0.0, %v800
        %v802 = vpop.f32.mrf.mxu0
        %803 = vmatprep.mubr.bf16.mxu0 0
        %804 = vmatmul.mubr.bf16.gmra.mxu0 %v589
        %v805 = vpop.f32.mrf.mxu0
        %v806 = vadd.f32 0.0, %v805
        %v807 = vpop.f32.mrf.mxu0
        %v808 = vpop.f32.mrf.mxu0
        %v809 = vadd.f32 0.0, %v808
        %v810 = vpop.f32.mrf.mxu0
        %811 = vmatprep.mubr.bf16.mxu0 0
        %812 = vmatmul.mubr.bf16.gmra.mxu0 %v592
        %v813 = vpop.f32.mrf.mxu0
        %v814 = vadd.f32 0.0, %v813
        %v815 = vpop.f32.mrf.mxu0
        %v816 = vpop.f32.mrf.mxu0
        %v817 = vadd.f32 0.0, %v816
        %v818 = vpop.f32.mrf.mxu0
        %819 = vmatprep.mubr.bf16.mxu0 0
        %820 = vmatmul.mubr.bf16.gmra.mxu0 %v595
        %v821 = vpop.f32.mrf.mxu0
        %v822 = vadd.f32 0.0, %v821
        %v823 = vpop.f32.mrf.mxu0
        %v824 = vpop.f32.mrf.mxu0
        %v825 = vadd.f32 0.0, %v824
        %v826 = vpop.f32.mrf.mxu0
        %827 = vmatprep.mubr.bf16.mxu0 0
        %828 = vmatmul.mubr.bf16.gmra.mxu0 %v598
        %v829 = vpop.f32.mrf.mxu0
        %v830 = vadd.f32 0.0, %v829
        %v831 = vpop.f32.mrf.mxu0
        %v832 = vpop.f32.mrf.mxu0
        %v833 = vadd.f32 0.0, %v832
        %v834 = vpop.f32.mrf.mxu0
        %835 = vmatprep.mubr.bf16.mxu0 0
        %836 = vmatmul.mubr.bf16.gmra.mxu0 %v601
        %v837 = vpop.f32.mrf.mxu0
        %v838 = vadd.f32 0.0, %v837
        %v839 = vpop.f32.mrf.mxu0
        %v840 = vpop.f32.mrf.mxu0
        %v841 = vadd.f32 0.0, %v840
        %v842 = vpop.f32.mrf.mxu0
        %843 = vmatprep.mubr.bf16.mxu0 0
        %844 = vmatmul.mubr.bf16.gmra.mxu0 %v604
        %v845 = vpop.f32.mrf.mxu0
        %v846 = vadd.f32 0.0, %v845
        %v847 = vpop.f32.mrf.mxu0
        %v848 = vpop.f32.mrf.mxu0
        %v849 = vadd.f32 0.0, %v848
        %v850 = vpop.f32.mrf.mxu0
        %851 = vmatprep.mubr.bf16.mxu0 0
        %852 = vmatmul.mubr.bf16.gmra.mxu0 %v607
        %v853 = vpop.f32.mrf.mxu0
        %v854 = vadd.f32 0.0, %v853
        %v855 = vpop.f32.mrf.mxu0
        %v856 = vpop.f32.mrf.mxu0
        %v857 = vadd.f32 0.0, %v856
        %v858 = vpop.f32.mrf.mxu0
        %859 = vmatprep.mubr.bf16.mxu0 0
        %860 = vmatmul.mubr.bf16.gmra.mxu0 %v610
        %v861 = vpop.f32.mrf.mxu0
        %v862 = vadd.f32 0.0, %v861
        %v863 = vpop.f32.mrf.mxu0
        %v864 = vpop.f32.mrf.mxu0
        %v865 = vadd.f32 0.0, %v864
        %v866 = vpop.f32.mrf.mxu0
        %867 = vmatprep.mubr.bf16.mxu0 0
        %868 = vmatmul.mubr.bf16.gmra.mxu0 %v613
        %v869 = vpop.f32.mrf.mxu0
        %v870 = vadd.f32 0.0, %v869
        %v871 = vpop.f32.mrf.mxu0
        %v872 = vpop.f32.mrf.mxu0
        %v873 = vadd.f32 0.0, %v872
        %v874 = vpop.f32.mrf.mxu0
        %875 = vmatprep.mubr.bf16.mxu0 0
        %876 = vmatmul.mubr.bf16.gmra.mxu0 %v616
        %v877 = vpop.f32.mrf.mxu0
        %v878 = vadd.f32 0.0, %v877
        %v879 = vpop.f32.mrf.mxu0
        %v880 = vpop.f32.mrf.mxu0
        %v881 = vadd.f32 0.0, %v880
        %v882 = vpop.f32.mrf.mxu0
        %883 = vmatprep.mubr.bf16.mxu0 0
        %884 = vmatmul.mubr.bf16.gmra.mxu0 %v619
        %v885 = vpop.f32.mrf.mxu0
        %v886 = vadd.f32 0.0, %v885
        %v887 = vpop.f32.mrf.mxu0
        %v888 = vpop.f32.mrf.mxu0
        %v889 = vadd.f32 0.0, %v888
        %v890 = vpop.f32.mrf.mxu0
        %891 = vmatprep.mubr.bf16.mxu0 0
        %892 = vmatmul.mubr.bf16.gmra.mxu0 %v622
        %v893 = vpop.f32.mrf.mxu0
        %v894 = vadd.f32 0.0, %v893
        %v895 = vpop.f32.mrf.mxu0
        %v896 = vpop.f32.mrf.mxu0
        %v897 = vadd.f32 0.0, %v896
        %v898 = vpop.f32.mrf.mxu0
        %899 = vmatprep.mubr.bf16.mxu0 0
        %900 = vmatmul.mubr.bf16.gmra.mxu0 %v625
        %v901 = vpop.f32.mrf.mxu0
        %v902 = vadd.f32 0.0, %v901
        %v903 = vpop.f32.mrf.mxu0
        %v904 = vpop.f32.mrf.mxu0
        %v905 = vadd.f32 0.0, %v904
        %v906 = vpop.f32.mrf.mxu0
        %907 = vmatprep.mubr.bf16.mxu0 0
        %908 = vmatmul.mubr.bf16.gmra.mxu0 %v628
        %v909 = vpop.f32.mrf.mxu0
        %v910 = vadd.f32 0.0, %v909
        %v911 = vpop.f32.mrf.mxu0
        %v912 = vpop.f32.mrf.mxu0
        %v913 = vadd.f32 0.0, %v912
        %v914 = vpop.f32.mrf.mxu0
        %915 = vmatprep.mubr.bf16.mxu0 0
        %916 = vmatmul.mubr.bf16.gmra.mxu0 %v631
        %v917 = vpop.f32.mrf.mxu0
        %v918 = vadd.f32 0.0, %v917
        %v919 = vpop.f32.mrf.mxu0
        %v920 = vpop.f32.mrf.mxu0
        %v921 = vadd.f32 0.0, %v920
        %v922 = vpop.f32.mrf.mxu0
        %923 = vmatprep.mubr.bf16.mxu0 0
        %924 = vmatmul.mubr.bf16.gmra.mxu0 %v634
        %v925 = vpop.f32.mrf.mxu0
        %v926 = vadd.f32 0.0, %v925
        %v927 = vpop.f32.mrf.mxu0
        %v928 = vpop.f32.mrf.mxu0
        %v929 = vadd.f32 0.0, %v928
        %v930 = vpop.f32.mrf.mxu0
        %931 = vdwg.mxu0
        %v932 = vld [vmem:[%s2] sm:$0x1]
        %v934 = vlaneseq
        %v935 = vshrl.u32 %v934, 7
        %v936 = vsub.s32 0, %v935
        %v937 = vrot.slane %v932, %v936
        %v939 = vmul.f32 %v678, %v937
        %v940 = vmul.f32 %v681, %v937
        %v941 = vmul.f32 %v686, %v937
        %v942 = vmul.f32 %v689, %v937
        %v943 = vmul.f32 %v694, %v937
        %v944 = vmul.f32 %v697, %v937
        %v945 = vmul.f32 %v702, %v937
        %v946 = vmul.f32 %v705, %v937
        %v947 = vmul.f32 %v710, %v937
        %v948 = vmul.f32 %v713, %v937
        %v949 = vmul.f32 %v718, %v937
        %v950 = vmul.f32 %v721, %v937
        %v951 = vmul.f32 %v726, %v937
        %v952 = vmul.f32 %v729, %v937
        %v953 = vmul.f32 %v734, %v937
        %v954 = vmul.f32 %v737, %v937
        %v955 = vmul.f32 %v742, %v937
        %v956 = vmul.f32 %v745, %v937
        %v957 = vmul.f32 %v750, %v937
        %v958 = vmul.f32 %v753, %v937
        %v959 = vmul.f32 %v758, %v937
        %v960 = vmul.f32 %v761, %v937
        %v961 = vmul.f32 %v766, %v937
        %v962 = vmul.f32 %v769, %v937
        %v963 = vmul.f32 %v774, %v937
        %v964 = vmul.f32 %v777, %v937
        %v965 = vmul.f32 %v782, %v937
        %v966 = vmul.f32 %v785, %v937
        %v967 = vmul.f32 %v790, %v937
        %v968 = vmul.f32 %v793, %v937
        %v969 = vmul.f32 %v798, %v937
        %v970 = vmul.f32 %v801, %v937
        %v971 = vmul.f32 %v806, %v937
        %v972 = vmul.f32 %v809, %v937
        %v973 = vmul.f32 %v814, %v937
        %v974 = vmul.f32 %v817, %v937
        %v975 = vmul.f32 %v822, %v937
        %v976 = vmul.f32 %v825, %v937
        %v977 = vmul.f32 %v830, %v937
        %v978 = vmul.f32 %v833, %v937
        %v979 = vmul.f32 %v838, %v937
        %v980 = vmul.f32 %v841, %v937
        %v981 = vmul.f32 %v846, %v937
        %v982 = vmul.f32 %v849, %v937
        %v983 = vmul.f32 %v854, %v937
        %v984 = vmul.f32 %v857, %v937
        %v985 = vmul.f32 %v862, %v937
        %v986 = vmul.f32 %v865, %v937
        %v987 = vmul.f32 %v870, %v937
        %v988 = vmul.f32 %v873, %v937
        %v989 = vmul.f32 %v878, %v937
        %v990 = vmul.f32 %v881, %v937
        %v991 = vmul.f32 %v886, %v937
        %v992 = vmul.f32 %v889, %v937
        %v993 = vmul.f32 %v894, %v937
        %v994 = vmul.f32 %v897, %v937
        %v995 = vmul.f32 %v902, %v937
        %v996 = vmul.f32 %v905, %v937
        %v997 = vmul.f32 %v910, %v937
        %v998 = vmul.f32 %v913, %v937
        %v999 = vmul.f32 %v918, %v937
        %v1000 = vmul.f32 %v921, %v937
        %v1001 = vmul.f32 %v926, %v937
        %v1002 = vmul.f32 %v929, %v937
        %v1003 = vld [vmem:[%s3] sm:$0x1]
        %v1005 = vlaneseq
        %v1006 = vshrl.u32 %v1005, 7
        %v1007 = vsub.s32 0, %v1006
        %v1008 = vrot.slane %v1003, %v1007
        %v1010 = vadd.f32 %v939, %v1008
        %v1011 = vadd.f32 %v940, %v1008
        %v1012 = vadd.f32 %v941, %v1008
        %v1013 = vadd.f32 %v942, %v1008
        %v1014 = vadd.f32 %v943, %v1008
        %v1015 = vadd.f32 %v944, %v1008
        %v1016 = vadd.f32 %v945, %v1008
        %v1017 = vadd.f32 %v946, %v1008
        %v1018 = vadd.f32 %v947, %v1008
        %v1019 = vadd.f32 %v948, %v1008
        %v1020 = vadd.f32 %v949, %v1008
        %v1021 = vadd.f32 %v950, %v1008
        %v1022 = vadd.f32 %v951, %v1008
        %v1023 = vadd.f32 %v952, %v1008
        %v1024 = vadd.f32 %v953, %v1008
        %v1025 = vadd.f32 %v954, %v1008
        %v1026 = vadd.f32 %v955, %v1008
        %v1027 = vadd.f32 %v956, %v1008
        %v1028 = vadd.f32 %v957, %v1008
        %v1029 = vadd.f32 %v958, %v1008
        %v1030 = vadd.f32 %v959, %v1008
        %v1031 = vadd.f32 %v960, %v1008
        %v1032 = vadd.f32 %v961, %v1008
        %v1033 = vadd.f32 %v962, %v1008
        %v1034 = vadd.f32 %v963, %v1008
        %v1035 = vadd.f32 %v964, %v1008
        %v1036 = vadd.f32 %v965, %v1008
        %v1037 = vadd.f32 %v966, %v1008
        %v1038 = vadd.f32 %v967, %v1008
        %v1039 = vadd.f32 %v968, %v1008
        %v1040 = vadd.f32 %v969, %v1008
        %v1041 = vadd.f32 %v970, %v1008
        %v1042 = vadd.f32 %v971, %v1008
        %v1043 = vadd.f32 %v972, %v1008
        %v1044 = vadd.f32 %v973, %v1008
        %v1045 = vadd.f32 %v974, %v1008
        %v1046 = vadd.f32 %v975, %v1008
        %v1047 = vadd.f32 %v976, %v1008
        %v1048 = vadd.f32 %v977, %v1008
        %v1049 = vadd.f32 %v978, %v1008
        %v1050 = vadd.f32 %v979, %v1008
        %v1051 = vadd.f32 %v980, %v1008
        %v1052 = vadd.f32 %v981, %v1008
        %v1053 = vadd.f32 %v982, %v1008
        %v1054 = vadd.f32 %v983, %v1008
        %v1055 = vadd.f32 %v984, %v1008
        %v1056 = vadd.f32 %v985, %v1008
        %v1057 = vadd.f32 %v986, %v1008
        %v1058 = vadd.f32 %v987, %v1008
        %v1059 = vadd.f32 %v988, %v1008
        %v1060 = vadd.f32 %v989, %v1008
        %v1061 = vadd.f32 %v990, %v1008
        %v1062 = vadd.f32 %v991, %v1008
        %v1063 = vadd.f32 %v992, %v1008
        %v1064 = vadd.f32 %v993, %v1008
        %v1065 = vadd.f32 %v994, %v1008
        %v1066 = vadd.f32 %v995, %v1008
        %v1067 = vadd.f32 %v996, %v1008
        %v1068 = vadd.f32 %v997, %v1008
        %v1069 = vadd.f32 %v998, %v1008
        %v1070 = vadd.f32 %v999, %v1008
        %v1071 = vadd.f32 %v1000, %v1008
        %v1072 = vadd.f32 %v1001, %v1008
        %v1073 = vadd.f32 %v1002, %v1008
        %vm1074 = vcmp.gt.f32.partialorder %v1010, 0.0
        %vm1075 = vcmp.gt.f32.partialorder %v1011, 0.0
        %vm1076 = vcmp.gt.f32.partialorder %v1012, 0.0
        %vm1077 = vcmp.gt.f32.partialorder %v1013, 0.0
        %vm1078 = vcmp.gt.f32.partialorder %v1014, 0.0
        %vm1079 = vcmp.gt.f32.partialorder %v1015, 0.0
        %vm1080 = vcmp.gt.f32.partialorder %v1016, 0.0
        %vm1081 = vcmp.gt.f32.partialorder %v1017, 0.0
        %vm1082 = vcmp.gt.f32.partialorder %v1018, 0.0
        %vm1083 = vcmp.gt.f32.partialorder %v1019, 0.0
        %vm1084 = vcmp.gt.f32.partialorder %v1020, 0.0
        %vm1085 = vcmp.gt.f32.partialorder %v1021, 0.0
        %vm1086 = vcmp.gt.f32.partialorder %v1022, 0.0
        %vm1087 = vcmp.gt.f32.partialorder %v1023, 0.0
        %vm1088 = vcmp.gt.f32.partialorder %v1024, 0.0
        %vm1089 = vcmp.gt.f32.partialorder %v1025, 0.0
        %vm1090 = vcmp.gt.f32.partialorder %v1026, 0.0
        %vm1091 = vcmp.gt.f32.partialorder %v1027, 0.0
        %vm1092 = vcmp.gt.f32.partialorder %v1028, 0.0
        %vm1093 = vcmp.gt.f32.partialorder %v1029, 0.0
        %vm1094 = vcmp.gt.f32.partialorder %v1030, 0.0
        %vm1095 = vcmp.gt.f32.partialorder %v1031, 0.0
        %vm1096 = vcmp.gt.f32.partialorder %v1032, 0.0
        %vm1097 = vcmp.gt.f32.partialorder %v1033, 0.0
        %vm1098 = vcmp.gt.f32.partialorder %v1034, 0.0
        %vm1099 = vcmp.gt.f32.partialorder %v1035, 0.0
        %vm1100 = vcmp.gt.f32.partialorder %v1036, 0.0
        %vm1101 = vcmp.gt.f32.partialorder %v1037, 0.0
        %vm1102 = vcmp.gt.f32.partialorder %v1038, 0.0
        %vm1103 = vcmp.gt.f32.partialorder %v1039, 0.0
        %vm1104 = vcmp.gt.f32.partialorder %v1040, 0.0
        %vm1105 = vcmp.gt.f32.partialorder %v1041, 0.0
        %vm1106 = vcmp.gt.f32.partialorder %v1042, 0.0
        %vm1107 = vcmp.gt.f32.partialorder %v1043, 0.0
        %vm1108 = vcmp.gt.f32.partialorder %v1044, 0.0
        %vm1109 = vcmp.gt.f32.partialorder %v1045, 0.0
        %vm1110 = vcmp.gt.f32.partialorder %v1046, 0.0
        %vm1111 = vcmp.gt.f32.partialorder %v1047, 0.0
        %vm1112 = vcmp.gt.f32.partialorder %v1048, 0.0
        %vm1113 = vcmp.gt.f32.partialorder %v1049, 0.0
        %vm1114 = vcmp.gt.f32.partialorder %v1050, 0.0
        %vm1115 = vcmp.gt.f32.partialorder %v1051, 0.0
        %vm1116 = vcmp.gt.f32.partialorder %v1052, 0.0
        %vm1117 = vcmp.gt.f32.partialorder %v1053, 0.0
        %vm1118 = vcmp.gt.f32.partialorder %v1054, 0.0
        %vm1119 = vcmp.gt.f32.partialorder %v1055, 0.0
        %vm1120 = vcmp.gt.f32.partialorder %v1056, 0.0
        %vm1121 = vcmp.gt.f32.partialorder %v1057, 0.0
        %vm1122 = vcmp.gt.f32.partialorder %v1058, 0.0
        %vm1123 = vcmp.gt.f32.partialorder %v1059, 0.0
        %vm1124 = vcmp.gt.f32.partialorder %v1060, 0.0
        %vm1125 = vcmp.gt.f32.partialorder %v1061, 0.0
        %vm1126 = vcmp.gt.f32.partialorder %v1062, 0.0
        %vm1127 = vcmp.gt.f32.partialorder %v1063, 0.0
        %vm1128 = vcmp.gt.f32.partialorder %v1064, 0.0
        %vm1129 = vcmp.gt.f32.partialorder %v1065, 0.0
        %vm1130 = vcmp.gt.f32.partialorder %v1066, 0.0
        %vm1131 = vcmp.gt.f32.partialorder %v1067, 0.0
        %vm1132 = vcmp.gt.f32.partialorder %v1068, 0.0
        %vm1133 = vcmp.gt.f32.partialorder %v1069, 0.0
        %vm1134 = vcmp.gt.f32.partialorder %v1070, 0.0
        %vm1135 = vcmp.gt.f32.partialorder %v1071, 0.0
        %vm1136 = vcmp.gt.f32.partialorder %v1072, 0.0
        %vm1137 = vcmp.gt.f32.partialorder %v1073, 0.0
        %v1138 = vld [vmem:[%s4] sm:$0x1]
        %v1140 = vlaneseq
        %v1141 = vshrl.u32 %v1140, 7
        %v1142 = vsub.s32 0, %v1141
        %v1143 = vrot.slane %v1138, %v1142
        %v1145 = vmul.f32 %v1010, %v1143
        %v1146 = vmul.f32 %v1011, %v1143
        %v1147 = vmul.f32 %v1012, %v1143
        %v1148 = vmul.f32 %v1013, %v1143
        %v1149 = vmul.f32 %v1014, %v1143
        %v1150 = vmul.f32 %v1015, %v1143
        %v1151 = vmul.f32 %v1016, %v1143
        %v1152 = vmul.f32 %v1017, %v1143
        %v1153 = vmul.f32 %v1018, %v1143
        %v1154 = vmul.f32 %v1019, %v1143
        %v1155 = vmul.f32 %v1020, %v1143
        %v1156 = vmul.f32 %v1021, %v1143
        %v1157 = vmul.f32 %v1022, %v1143
        %v1158 = vmul.f32 %v1023, %v1143
        %v1159 = vmul.f32 %v1024, %v1143
        %v1160 = vmul.f32 %v1025, %v1143
        %v1161 = vmul.f32 %v1026, %v1143
        %v1162 = vmul.f32 %v1027, %v1143
        %v1163 = vmul.f32 %v1028, %v1143
        %v1164 = vmul.f32 %v1029, %v1143
        %v1165 = vmul.f32 %v1030, %v1143
        %v1166 = vmul.f32 %v1031, %v1143
        %v1167 = vmul.f32 %v1032, %v1143
        %v1168 = vmul.f32 %v1033, %v1143
        %v1169 = vmul.f32 %v1034, %v1143
        %v1170 = vmul.f32 %v1035, %v1143
        %v1171 = vmul.f32 %v1036, %v1143
        %v1172 = vmul.f32 %v1037, %v1143
        %v1173 = vmul.f32 %v1038, %v1143
        %v1174 = vmul.f32 %v1039, %v1143
        %v1175 = vmul.f32 %v1040, %v1143
        %v1176 = vmul.f32 %v1041, %v1143
        %v1177 = vmul.f32 %v1042, %v1143
        %v1178 = vmul.f32 %v1043, %v1143
        %v1179 = vmul.f32 %v1044, %v1143
        %v1180 = vmul.f32 %v1045, %v1143
        %v1181 = vmul.f32 %v1046, %v1143
        %v1182 = vmul.f32 %v1047, %v1143
        %v1183 = vmul.f32 %v1048, %v1143
        %v1184 = vmul.f32 %v1049, %v1143
        %v1185 = vmul.f32 %v1050, %v1143
        %v1186 = vmul.f32 %v1051, %v1143
        %v1187 = vmul.f32 %v1052, %v1143
        %v1188 = vmul.f32 %v1053, %v1143
        %v1189 = vmul.f32 %v1054, %v1143
        %v1190 = vmul.f32 %v1055, %v1143
        %v1191 = vmul.f32 %v1056, %v1143
        %v1192 = vmul.f32 %v1057, %v1143
        %v1193 = vmul.f32 %v1058, %v1143
        %v1194 = vmul.f32 %v1059, %v1143
        %v1195 = vmul.f32 %v1060, %v1143
        %v1196 = vmul.f32 %v1061, %v1143
        %v1197 = vmul.f32 %v1062, %v1143
        %v1198 = vmul.f32 %v1063, %v1143
        %v1199 = vmul.f32 %v1064, %v1143
        %v1200 = vmul.f32 %v1065, %v1143
        %v1201 = vmul.f32 %v1066, %v1143
        %v1202 = vmul.f32 %v1067, %v1143
        %v1203 = vmul.f32 %v1068, %v1143
        %v1204 = vmul.f32 %v1069, %v1143
        %v1205 = vmul.f32 %v1070, %v1143
        %v1206 = vmul.f32 %v1071, %v1143
        %v1207 = vmul.f32 %v1072, %v1143
        %v1208 = vmul.f32 %v1073, %v1143
        %v1209 = vsel %vm1074, %v1010, %v1145
        %v1210 = vsel %vm1075, %v1011, %v1146
        %v1211 = vsel %vm1076, %v1012, %v1147
        %v1212 = vsel %vm1077, %v1013, %v1148
        %v1213 = vsel %vm1078, %v1014, %v1149
        %v1214 = vsel %vm1079, %v1015, %v1150
        %v1215 = vsel %vm1080, %v1016, %v1151
        %v1216 = vsel %vm1081, %v1017, %v1152
        %v1217 = vsel %vm1082, %v1018, %v1153
        %v1218 = vsel %vm1083, %v1019, %v1154
        %v1219 = vsel %vm1084, %v1020, %v1155
        %v1220 = vsel %vm1085, %v1021, %v1156
        %v1221 = vsel %vm1086, %v1022, %v1157
        %v1222 = vsel %vm1087, %v1023, %v1158
        %v1223 = vsel %vm1088, %v1024, %v1159
        %v1224 = vsel %vm1089, %v1025, %v1160
        %v1225 = vsel %vm1090, %v1026, %v1161
        %v1226 = vsel %vm1091, %v1027, %v1162
        %v1227 = vsel %vm1092, %v1028, %v1163
        %v1228 = vsel %vm1093, %v1029, %v1164
        %v1229 = vsel %vm1094, %v1030, %v1165
        %v1230 = vsel %vm1095, %v1031, %v1166
        %v1231 = vsel %vm1096, %v1032, %v1167
        %v1232 = vsel %vm1097, %v1033, %v1168
        %v1233 = vsel %vm1098, %v1034, %v1169
        %v1234 = vsel %vm1099, %v1035, %v1170
        %v1235 = vsel %vm1100, %v1036, %v1171
        %v1236 = vsel %vm1101, %v1037, %v1172
        %v1237 = vsel %vm1102, %v1038, %v1173
        %v1238 = vsel %vm1103, %v1039, %v1174
        %v1239 = vsel %vm1104, %v1040, %v1175
        %v1240 = vsel %vm1105, %v1041, %v1176
        %v1241 = vsel %vm1106, %v1042, %v1177
        %v1242 = vsel %vm1107, %v1043, %v1178
        %v1243 = vsel %vm1108, %v1044, %v1179
        %v1244 = vsel %vm1109, %v1045, %v1180
        %v1245 = vsel %vm1110, %v1046, %v1181
        %v1246 = vsel %vm1111, %v1047, %v1182
        %v1247 = vsel %vm1112, %v1048, %v1183
        %v1248 = vsel %vm1113, %v1049, %v1184
        %v1249 = vsel %vm1114, %v1050, %v1185
        %v1250 = vsel %vm1115, %v1051, %v1186
        %v1251 = vsel %vm1116, %v1052, %v1187
        %v1252 = vsel %vm1117, %v1053, %v1188
        %v1253 = vsel %vm1118, %v1054, %v1189
        %v1254 = vsel %vm1119, %v1055, %v1190
        %v1255 = vsel %vm1120, %v1056, %v1191
        %v1256 = vsel %vm1121, %v1057, %v1192
        %v1257 = vsel %vm1122, %v1058, %v1193
        %v1258 = vsel %vm1123, %v1059, %v1194
        %v1259 = vsel %vm1124, %v1060, %v1195
        %v1260 = vsel %vm1125, %v1061, %v1196
        %v1261 = vsel %vm1126, %v1062, %v1197
        %v1262 = vsel %vm1127, %v1063, %v1198
        %v1263 = vsel %vm1128, %v1064, %v1199
        %v1264 = vsel %vm1129, %v1065, %v1200
        %v1265 = vsel %vm1130, %v1066, %v1201
        %v1266 = vsel %vm1131, %v1067, %v1202
        %v1267 = vsel %vm1132, %v1068, %v1203
        %v1268 = vsel %vm1133, %v1069, %v1204
        %v1269 = vsel %vm1134, %v1070, %v1205
        %v1270 = vsel %vm1135, %v1071, %v1206
        %v1271 = vsel %vm1136, %v1072, %v1207
        %v1272 = vsel %vm1137, %v1073, %v1208
        %v1273 = vld [vmem:[%s295] sm:$0x1]
        %v1275 = vlaneseq
        %v1276 = vshrl.u32 %v1275, 7
        %v1277 = vsub.s32 0, %v1276
        %v1278 = vrot.slane %v1273, %v1277
        %v1280 = vmul.f32 %v1209, %v1278
        %v1281 = vmul.f32 %v1210, %v1278
        %v1282 = vmul.f32 %v1211, %v1278
        %v1283 = vmul.f32 %v1212, %v1278
        %v1284 = vmul.f32 %v1213, %v1278
        %v1285 = vmul.f32 %v1214, %v1278
        %v1286 = vmul.f32 %v1215, %v1278
        %v1287 = vmul.f32 %v1216, %v1278
        %v1288 = vmul.f32 %v1217, %v1278
        %v1289 = vmul.f32 %v1218, %v1278
        %v1290 = vmul.f32 %v1219, %v1278
        %v1291 = vmul.f32 %v1220, %v1278
        %v1292 = vmul.f32 %v1221, %v1278
        %v1293 = vmul.f32 %v1222, %v1278
        %v1294 = vmul.f32 %v1223, %v1278
        %v1295 = vmul.f32 %v1224, %v1278
        %v1296 = vmul.f32 %v1225, %v1278
        %v1297 = vmul.f32 %v1226, %v1278
        %v1298 = vmul.f32 %v1227, %v1278
        %v1299 = vmul.f32 %v1228, %v1278
        %v1300 = vmul.f32 %v1229, %v1278
        %v1301 = vmul.f32 %v1230, %v1278
        %v1302 = vmul.f32 %v1231, %v1278
        %v1303 = vmul.f32 %v1232, %v1278
        %v1304 = vmul.f32 %v1233, %v1278
        %v1305 = vmul.f32 %v1234, %v1278
        %v1306 = vmul.f32 %v1235, %v1278
        %v1307 = vmul.f32 %v1236, %v1278
        %v1308 = vmul.f32 %v1237, %v1278
        %v1309 = vmul.f32 %v1238, %v1278
        %v1310 = vmul.f32 %v1239, %v1278
        %v1311 = vmul.f32 %v1240, %v1278
        %v1312 = vmul.f32 %v1241, %v1278
        %v1313 = vmul.f32 %v1242, %v1278
        %v1314 = vmul.f32 %v1243, %v1278
        %v1315 = vmul.f32 %v1244, %v1278
        %v1316 = vmul.f32 %v1245, %v1278
        %v1317 = vmul.f32 %v1246, %v1278
        %v1318 = vmul.f32 %v1247, %v1278
        %v1319 = vmul.f32 %v1248, %v1278
        %v1320 = vmul.f32 %v1249, %v1278
        %v1321 = vmul.f32 %v1250, %v1278
        %v1322 = vmul.f32 %v1251, %v1278
        %v1323 = vmul.f32 %v1252, %v1278
        %v1324 = vmul.f32 %v1253, %v1278
        %v1325 = vmul.f32 %v1254, %v1278
        %v1326 = vmul.f32 %v1255, %v1278
        %v1327 = vmul.f32 %v1256, %v1278
        %v1328 = vmul.f32 %v1257, %v1278
        %v1329 = vmul.f32 %v1258, %v1278
        %v1330 = vmul.f32 %v1259, %v1278
        %v1331 = vmul.f32 %v1260, %v1278
        %v1332 = vmul.f32 %v1261, %v1278
        %v1333 = vmul.f32 %v1262, %v1278
        %v1334 = vmul.f32 %v1263, %v1278
        %v1335 = vmul.f32 %v1264, %v1278
        %v1336 = vmul.f32 %v1265, %v1278
        %v1337 = vmul.f32 %v1266, %v1278
        %v1338 = vmul.f32 %v1267, %v1278
        %v1339 = vmul.f32 %v1268, %v1278
        %v1340 = vmul.f32 %v1269, %v1278
        %v1341 = vmul.f32 %v1270, %v1278
        %v1342 = vmul.f32 %v1271, %v1278
        %v1343 = vmul.f32 %v1272, %v1278
        %v1344 = vpack.c.bf16 %v1281, %v1280
        %v1345 = vpack.c.bf16 %v1283, %v1282
        %v1346 = vpack.c.bf16 %v1285, %v1284
        %v1347 = vpack.c.bf16 %v1287, %v1286
        %v1348 = vpack.c.bf16 %v1289, %v1288
        %v1349 = vpack.c.bf16 %v1291, %v1290
        %v1350 = vpack.c.bf16 %v1293, %v1292
        %v1351 = vpack.c.bf16 %v1295, %v1294
        %v1352 = vpack.c.bf16 %v1297, %v1296
        %v1353 = vpack.c.bf16 %v1299, %v1298
        %v1354 = vpack.c.bf16 %v1301, %v1300
        %v1355 = vpack.c.bf16 %v1303, %v1302
        %v1356 = vpack.c.bf16 %v1305, %v1304
        %v1357 = vpack.c.bf16 %v1307, %v1306
        %v1358 = vpack.c.bf16 %v1309, %v1308
        %v1359 = vpack.c.bf16 %v1311, %v1310
        %v1360 = vpack.c.bf16 %v1313, %v1312
        %v1361 = vpack.c.bf16 %v1315, %v1314
        %v1362 = vpack.c.bf16 %v1317, %v1316
        %v1363 = vpack.c.bf16 %v1319, %v1318
        %v1364 = vpack.c.bf16 %v1321, %v1320
        %v1365 = vpack.c.bf16 %v1323, %v1322
        %v1366 = vpack.c.bf16 %v1325, %v1324
        %v1367 = vpack.c.bf16 %v1327, %v1326
        %v1368 = vpack.c.bf16 %v1329, %v1328
        %v1369 = vpack.c.bf16 %v1331, %v1330
        %v1370 = vpack.c.bf16 %v1333, %v1332
        %v1371 = vpack.c.bf16 %v1335, %v1334
        %v1372 = vpack.c.bf16 %v1337, %v1336
        %v1373 = vpack.c.bf16 %v1339, %v1338
        %v1374 = vpack.c.bf16 %v1341, %v1340
        %v1375 = vpack.c.bf16 %v1343, %v1342
        %v1408 = vunpack.c.l.b16 %v1344
        %v1409 = vunpack.c.h.b16 %v1344
        %v1410 = vunpack.c.l.b16 %v1345
        %v1411 = vunpack.c.h.b16 %v1345
        %v1412 = vunpack.c.l.b16 %v1346
        %v1413 = vunpack.c.h.b16 %v1346
        %v1414 = vunpack.c.l.b16 %v1347
        %v1415 = vunpack.c.h.b16 %v1347
        %v1416 = vunpack.c.l.b16 %v1348
        %v1417 = vunpack.c.h.b16 %v1348
        %v1418 = vunpack.c.l.b16 %v1349
        %v1419 = vunpack.c.h.b16 %v1349
        %v1420 = vunpack.c.l.b16 %v1350
        %v1421 = vunpack.c.h.b16 %v1350
        %v1422 = vunpack.c.l.b16 %v1351
        %v1423 = vunpack.c.h.b16 %v1351
        %v1424 = vunpack.c.l.b16 %v1352
        %v1425 = vunpack.c.h.b16 %v1352
        %v1426 = vunpack.c.l.b16 %v1353
        %v1427 = vunpack.c.h.b16 %v1353
        %v1428 = vunpack.c.l.b16 %v1354
        %v1429 = vunpack.c.h.b16 %v1354
        %v1430 = vunpack.c.l.b16 %v1355
        %v1431 = vunpack.c.h.b16 %v1355
        %v1432 = vunpack.c.l.b16 %v1356
        %v1433 = vunpack.c.h.b16 %v1356
        %v1434 = vunpack.c.l.b16 %v1357
        %v1435 = vunpack.c.h.b16 %v1357
        %v1436 = vunpack.c.l.b16 %v1358
        %v1437 = vunpack.c.h.b16 %v1358
        %v1438 = vunpack.c.l.b16 %v1359
        %v1439 = vunpack.c.h.b16 %v1359
        %v1440 = vunpack.c.l.b16 %v1360
        %v1441 = vunpack.c.h.b16 %v1360
        %v1442 = vunpack.c.l.b16 %v1361
        %v1443 = vunpack.c.h.b16 %v1361
        %v1444 = vunpack.c.l.b16 %v1362
        %v1445 = vunpack.c.h.b16 %v1362
        %v1446 = vunpack.c.l.b16 %v1363
        %v1447 = vunpack.c.h.b16 %v1363
        %v1448 = vunpack.c.l.b16 %v1364
        %v1449 = vunpack.c.h.b16 %v1364
        %v1450 = vunpack.c.l.b16 %v1365
        %v1451 = vunpack.c.h.b16 %v1365
        %v1452 = vunpack.c.l.b16 %v1366
        %v1453 = vunpack.c.h.b16 %v1366
        %v1454 = vunpack.c.l.b16 %v1367
        %v1455 = vunpack.c.h.b16 %v1367
        %v1456 = vunpack.c.l.b16 %v1368
        %v1457 = vunpack.c.h.b16 %v1368
        %v1458 = vunpack.c.l.b16 %v1369
        %v1459 = vunpack.c.h.b16 %v1369
        %v1460 = vunpack.c.l.b16 %v1370
        %v1461 = vunpack.c.h.b16 %v1370
        %v1462 = vunpack.c.l.b16 %v1371
        %v1463 = vunpack.c.h.b16 %v1371
        %v1464 = vunpack.c.l.b16 %v1372
        %v1465 = vunpack.c.h.b16 %v1372
        %v1466 = vunpack.c.l.b16 %v1373
        %v1467 = vunpack.c.h.b16 %v1373
        %v1468 = vunpack.c.l.b16 %v1374
        %v1469 = vunpack.c.h.b16 %v1374
        %v1470 = vunpack.c.l.b16 %v1375
        %v1471 = vunpack.c.h.b16 %v1375
        %v1472 = vpack.c.b16 %v1408, %v1408
        %v1473 = vpack.c.b16 %v1409, %v1409
        %v1474 = vpack.c.b16 %v1410, %v1410
        %v1475 = vpack.c.b16 %v1411, %v1411
        %v1476 = vpack.c.b16 %v1412, %v1412
        %v1477 = vpack.c.b16 %v1413, %v1413
        %v1478 = vpack.c.b16 %v1414, %v1414
        %v1479 = vpack.c.b16 %v1415, %v1415
        %v1480 = vpack.c.b16 %v1416, %v1416
        %v1481 = vpack.c.b16 %v1417, %v1417
        %v1482 = vpack.c.b16 %v1418, %v1418
        %v1483 = vpack.c.b16 %v1419, %v1419
        %v1484 = vpack.c.b16 %v1420, %v1420
        %v1485 = vpack.c.b16 %v1421, %v1421
        %v1486 = vpack.c.b16 %v1422, %v1422
        %v1487 = vpack.c.b16 %v1423, %v1423
        %v1488 = vpack.c.b16 %v1424, %v1424
        %v1489 = vpack.c.b16 %v1425, %v1425
        %v1490 = vpack.c.b16 %v1426, %v1426
        %v1491 = vpack.c.b16 %v1427, %v1427
        %v1492 = vpack.c.b16 %v1428, %v1428
        %v1493 = vpack.c.b16 %v1429, %v1429
        %v1494 = vpack.c.b16 %v1430, %v1430
        %v1495 = vpack.c.b16 %v1431, %v1431
        %v1496 = vpack.c.b16 %v1432, %v1432
        %v1497 = vpack.c.b16 %v1433, %v1433
        %v1498 = vpack.c.b16 %v1434, %v1434
        %v1499 = vpack.c.b16 %v1435, %v1435
        %v1500 = vpack.c.b16 %v1436, %v1436
        %v1501 = vpack.c.b16 %v1437, %v1437
        %v1502 = vpack.c.b16 %v1438, %v1438
        %v1503 = vpack.c.b16 %v1439, %v1439
        %v1504 = vpack.c.b16 %v1440, %v1440
        %v1505 = vpack.c.b16 %v1441, %v1441
        %v1506 = vpack.c.b16 %v1442, %v1442
        %v1507 = vpack.c.b16 %v1443, %v1443
        %v1508 = vpack.c.b16 %v1444, %v1444
        %v1509 = vpack.c.b16 %v1445, %v1445
        %v1510 = vpack.c.b16 %v1446, %v1446
        %v1511 = vpack.c.b16 %v1447, %v1447
        %v1512 = vpack.c.b16 %v1448, %v1448
        %v1513 = vpack.c.b16 %v1449, %v1449
        %v1514 = vpack.c.b16 %v1450, %v1450
        %v1515 = vpack.c.b16 %v1451, %v1451
        %v1516 = vpack.c.b16 %v1452, %v1452
        %v1517 = vpack.c.b16 %v1453, %v1453
        %v1518 = vpack.c.b16 %v1454, %v1454
        %v1519 = vpack.c.b16 %v1455, %v1455
        %v1520 = vpack.c.b16 %v1456, %v1456
        %v1521 = vpack.c.b16 %v1457, %v1457
        %v1522 = vpack.c.b16 %v1458, %v1458
        %v1523 = vpack.c.b16 %v1459, %v1459
        %v1524 = vpack.c.b16 %v1460, %v1460
        %v1525 = vpack.c.b16 %v1461, %v1461
        %v1526 = vpack.c.b16 %v1462, %v1462
        %v1527 = vpack.c.b16 %v1463, %v1463
        %v1528 = vpack.c.b16 %v1464, %v1464
        %v1529 = vpack.c.b16 %v1465, %v1465
        %v1530 = vpack.c.b16 %v1466, %v1466
        %v1531 = vpack.c.b16 %v1467, %v1467
        %v1532 = vpack.c.b16 %v1468, %v1468
        %v1533 = vpack.c.b16 %v1469, %v1469
        %v1534 = vpack.c.b16 %v1470, %v1470
        %v1535 = vpack.c.b16 %v1471, %v1471
        %1600 = vst [vmem:[%s282] sm:$0xf] %v1472
        %1601 = vst [vmem:[%s282 + $0x4] sm:$0xf] %v1473
        %1602 = vst [vmem:[%s282 + $0x8] sm:$0xf] %v1474
        %1603 = vst [vmem:[%s282 + $0xc] sm:$0xf] %v1475
        %1604 = vst [vmem:[%s282 + $0x10] sm:$0xf] %v1476
        %1605 = vst [vmem:[%s282 + $0x14] sm:$0xf] %v1477
        %1606 = vst [vmem:[%s282 + $0x18] sm:$0xf] %v1478
        %1607 = vst [vmem:[%s282 + $0x1c] sm:$0xf] %v1479
        %1608 = vst [vmem:[%s282 + $0x20] sm:$0xf] %v1480
        %1609 = vst [vmem:[%s282 + $0x24] sm:$0xf] %v1481
        %1610 = vst [vmem:[%s282 + $0x28] sm:$0xf] %v1482
        %1611 = vst [vmem:[%s282 + $0x2c] sm:$0xf] %v1483
        %1612 = vst [vmem:[%s282 + $0x30] sm:$0xf] %v1484
        %1613 = vst [vmem:[%s282 + $0x34] sm:$0xf] %v1485
        %1614 = vst [vmem:[%s282 + $0x38] sm:$0xf] %v1486
        %1615 = vst [vmem:[%s282 + $0x3c] sm:$0xf] %v1487
        %1616 = vst [vmem:[%s282 + $0x40] sm:$0xf] %v1488
        %1617 = vst [vmem:[%s282 + $0x44] sm:$0xf] %v1489
        %1618 = vst [vmem:[%s282 + $0x48] sm:$0xf] %v1490
        %1619 = vst [vmem:[%s282 + $0x4c] sm:$0xf] %v1491
        %1620 = vst [vmem:[%s282 + $0x50] sm:$0xf] %v1492
        %1621 = vst [vmem:[%s282 + $0x54] sm:$0xf] %v1493
        %1622 = vst [vmem:[%s282 + $0x58] sm:$0xf] %v1494
        %1623 = vst [vmem:[%s282 + $0x5c] sm:$0xf] %v1495
        %1624 = vst [vmem:[%s282 + $0x60] sm:$0xf] %v1496
        %1625 = vst [vmem:[%s282 + $0x64] sm:$0xf] %v1497
        %1626 = vst [vmem:[%s282 + $0x68] sm:$0xf] %v1498
        %1627 = vst [vmem:[%s282 + $0x6c] sm:$0xf] %v1499
        %1628 = vst [vmem:[%s282 + $0x70] sm:$0xf] %v1500
        %1629 = vst [vmem:[%s282 + $0x74] sm:$0xf] %v1501
        %1630 = vst [vmem:[%s282 + $0x78] sm:$0xf] %v1502
        %1631 = vst [vmem:[%s282 + $0x7c] sm:$0xf] %v1503
        %1632 = vst [vmem:[%s282 + $0x80] sm:$0xf] %v1504
        %1633 = vst [vmem:[%s282 + $0x84] sm:$0xf] %v1505
        %1634 = vst [vmem:[%s282 + $0x88] sm:$0xf] %v1506
        %1635 = vst [vmem:[%s282 + $0x8c] sm:$0xf] %v1507
        %1636 = vst [vmem:[%s282 + $0x90] sm:$0xf] %v1508
        %1637 = vst [vmem:[%s282 + $0x94] sm:$0xf] %v1509
        %1638 = vst [vmem:[%s282 + $0x98] sm:$0xf] %v1510
        %1639 = vst [vmem:[%s282 + $0x9c] sm:$0xf] %v1511
        %1640 = vst [vmem:[%s282 + $0xa0] sm:$0xf] %v1512
        %1641 = vst [vmem:[%s282 + $0xa4] sm:$0xf] %v1513
        %1642 = vst [vmem:[%s282 + $0xa8] sm:$0xf] %v1514
        %1643 = vst [vmem:[%s282 + $0xac] sm:$0xf] %v1515
        %1644 = vst [vmem:[%s282 + $0xb0] sm:$0xf] %v1516
        %1645 = vst [vmem:[%s282 + $0xb4] sm:$0xf] %v1517
        %1646 = vst [vmem:[%s282 + $0xb8] sm:$0xf] %v1518
        %1647 = vst [vmem:[%s282 + $0xbc] sm:$0xf] %v1519
        %1648 = vst [vmem:[%s282 + $0xc0] sm:$0xf] %v1520
        %1649 = vst [vmem:[%s282 + $0xc4] sm:$0xf] %v1521
        %1650 = vst [vmem:[%s282 + $0xc8] sm:$0xf] %v1522
        %1651 = vst [vmem:[%s282 + $0xcc] sm:$0xf] %v1523
        %1652 = vst [vmem:[%s282 + $0xd0] sm:$0xf] %v1524
        %1653 = vst [vmem:[%s282 + $0xd4] sm:$0xf] %v1525
        %1654 = vst [vmem:[%s282 + $0xd8] sm:$0xf] %v1526
        %1655 = vst [vmem:[%s282 + $0xdc] sm:$0xf] %v1527
        %1656 = vst [vmem:[%s282 + $0xe0] sm:$0xf] %v1528
        %1657 = vst [vmem:[%s282 + $0xe4] sm:$0xf] %v1529
        %1658 = vst [vmem:[%s282 + $0xe8] sm:$0xf] %v1530
        %1659 = vst [vmem:[%s282 + $0xec] sm:$0xf] %v1531
        %1660 = vst [vmem:[%s282 + $0xf0] sm:$0xf] %v1532
        %1661 = vst [vmem:[%s282 + $0xf4] sm:$0xf] %v1533
        %1662 = vst [vmem:[%s282 + $0xf8] sm:$0xf] %v1534
        %1663 = vst [vmem:[%s282 + $0xfc] sm:$0xf] %v1535
        %s1664 = sand.u32 %s184, 1
        %s1665 = scalar_lea.sflag [#allocation3], %s1664
        %s1666 = sand.u32 %s184, 1
        %s1667 = smul.addr %s1666, 256
        %s1668 = scalar_lea.vmem [#allocation2], %s1667
        // Predicated region
        $region45: #{tpu_custom_call.1} parent=43 // pred_check
          %p1669 = pneg %p194
        $region46: #{tpu_custom_call.1} parent=43 // pred_check_branch
          %1671 = sbr.rel (%p1669) target = $region48
        $region47: #{tpu_custom_call.1} parent=43 // pred_region
          %s1672 = smul.u32 %s24, 4
          %s1673 = sadd.s32 %s1672, %s25
          %s1674 = smul.u32 64, %s1673
          %s1676 = ssub.s32 4096, 4096
          %1677 = vsyncadd %s1665, %s1676
          %s1678 = smul.addr %s1674, 64
          %s1679 = scalar_lea.hbm %s6, %s1678
          %s1680 = sshll.u32 %s1668, 4
          %s1681 = int_to_ptr.vmem [resolvable:$true] %s1680
          %1686 = dma.vmem_to_hbm [thread:$0]  %s1681, 4096, %s1679, %s1665, 64, 64, 4
        $region48: #{tpu_custom_call.1} parent=43 // pred_fallthru
          _
      $region44: #{tpu_custom_call.1} parent=5 // pred_fallthru
        _
      %p1687 = scmp.le.s32.totalorder 2, %s15
      // Predicated region
      $region49: #{tpu_custom_call.1} parent=5 // pred_check
        %p1688 = pneg %p1687
      $region50: #{tpu_custom_call.1} parent=5 // pred_check_branch
        %1690 = sbr.rel (%p1688) target = $region52
      $region51: #{tpu_custom_call.1} parent=5 // pred_region
        %s1691 = ssub.s32 %s15, 2
        // Predicated region
        $region53: #{tpu_custom_call.1} parent=51 // pred_check
          %p1692 = pneg %p200
        $region54: #{tpu_custom_call.1} parent=51 // pred_check_branch
          %1694 = sbr.rel (%p1692) target = $region56
        $region55: #{tpu_custom_call.1} parent=51 // pred_region
          %s1695 = sand.u32 %s185, 1
          %s1696 = scalar_lea.sflag [#allocation3], %s1695
          %s1697 = sand.u32 %s185, 1
          %s1698 = smul.addr %s1697, 256
          %s1699 = scalar_lea.vmem [#allocation2], %s1698
          %1700 = dma.done %s1696, 4096
        $region56: #{tpu_custom_call.1} parent=51 // pred_fallthru
          _
      $region52: #{tpu_custom_call.1} parent=5 // pred_fallthru
        _
    $region6: #{tpu_custom_call.1} parent=1 // loop_footer
      %s19 = sadd.s32 1, %s15
    $region7: #{tpu_custom_call.1} parent=1 // loop_footer_branch
      %14 = sbr.rel target = $region3
    $region8: #{tpu_custom_call.1} parent=1 // loop_exit
      _
    %1701 = vsyncpa [#allocation3], 1
    %s1702 = scalar_lea.sflag [#allocation3], 1
    %1703 = vsyncpa %s1702, 1

</llo_original>
